<compile_context>
chip_gen: v7x
topology: tpu7x:2x2x1
jax: 0.10.0
libtpu: 0.0.40
codegen_flags: <defaults>
</compile_context>

<pallas_src>
import math

import jax
import jax.numpy as jnp
from jax.experimental import pallas as pl
from jax.experimental.pallas import tpu as pltpu

# Small synthetic CLIP text-tower configuration.
B, S, V, D, H, L, E = 2, 8, 16, 32, 4, 2, 32   # batch, seq, vocab, width, heads, layers, embed
DH = D // H
FF = 4 * D
NEG_INF = -1e9          # finite stand-in for -inf in the causal attention mask
LN_EPS = 1e-5


def _layer_norm(x, gamma, beta, eps=LN_EPS):
    mu = jnp.mean(x, axis=-1, keepdims=True)
    var = jnp.mean(jnp.square(x - mu), axis=-1, keepdims=True)
    return (x - mu) * jax.lax.rsqrt(var + eps) * gamma + beta


# --------------------------------------------------------------------------------------
# Pallas kernel 1: the whole transformer stack, one grid step per layer.
#   x = x + MHA(LN1(x))   (causal mask, nn.MultiheadAttention semantics)
#   x = x + MLP(LN2(x))   (c_fc -> QuickGELU -> c_proj)
# Weights arrive stacked (L, ...) and pre-transposed (in, out), matmul weights in bf16.
# The activation is carried across the layer axis in a VMEM scratch accumulator.
# --------------------------------------------------------------------------------------
def transformer_kernel(x_ref,
                       ln1_w, ln1_b, w_in_t, b_in, w_out_t, b_out,
                       ln2_w, ln2_b, w_fc_t, b_fc, w_proj_t, b_proj,
                       o_ref, x_carry):
    l = pl.program_id(0)

    @pl.when(l == 0)
    def _():
        x_carry[...] = x_ref[...].astype(jnp.float32)

    x = x_carry[...]                                                      # (B, S, D) f32

    # ---- pre-LN multi-head causal self-attention ----
    xn = _layer_norm(x, ln1_w[0], ln1_b[0])
    qkv = jnp.dot(xn.reshape(B * S, D).astype(jnp.bfloat16), w_in_t[0],
                  preferred_element_type=jnp.float32) + b_in[0]           # (B*S, 3D) f32

    scale = 1.0 / math.sqrt(DH)
    q = (qkv[:, 0 * D:1 * D] * scale).reshape(B, S, D)   # fold scale into q once
    k = qkv[:, 1 * D:2 * D].reshape(B, S, D)
    v = qkv[:, 2 * D:3 * D].reshape(B, S, D)

    # Stack heads along a leading batch axis -> single all-heads contraction,
    # no per-head scratch stores.  Shapes: (H*B, S, DH).
    qh = jnp.concatenate([q[:, :, h * DH:(h + 1) * DH] for h in range(H)], axis=0)
    kh = jnp.concatenate([k[:, :, h * DH:(h + 1) * DH] for h in range(H)], axis=0)
    vh = jnp.concatenate([v[:, :, h * DH:(h + 1) * DH] for h in range(H)], axis=0)

    s = jnp.einsum('bsd,btd->bst',
                   qh.astype(jnp.bfloat16), kh.astype(jnp.bfloat16),
                   preferred_element_type=jnp.float32)                    # (H*B, S, S) f32

    # causal mask built in-kernel (no DMA'd mask input)
    rows = jax.lax.broadcasted_iota(jnp.int32, (H * B, S, S), 1)
    cols = jax.lax.broadcasted_iota(jnp.int32, (H * B, S, S), 2)
    s = jnp.where(cols > rows, NEG_INF, s)

    m = jnp.max(s, axis=-1, keepdims=True)
    p = jnp.exp(s - m)
    p = p * pl.reciprocal(jnp.sum(p, axis=-1, keepdims=True), approx=True)

    av = jnp.einsum('bst,btd->bsd',
                    p.astype(jnp.bfloat16), vh.astype(jnp.bfloat16),
                    preferred_element_type=jnp.float32)                   # (H*B, S, DH)
    attn = jnp.concatenate([av[h * B:(h + 1) * B] for h in range(H)], axis=-1)  # (B,S,D)

    attn = jnp.dot(attn.reshape(B * S, D).astype(jnp.bfloat16), w_out_t[0],
                   preferred_element_type=jnp.float32) + b_out[0]
    x = x + attn.reshape(B, S, D)

    # ---- MLP with QuickGELU (elementwise kept in f32) ----
    xn2 = _layer_norm(x, ln2_w[0], ln2_b[0])
    hdn = jnp.dot(xn2.reshape(B * S, D).astype(jnp.bfloat16), w_fc_t[0],
                  preferred_element_type=jnp.float32) + b_fc[0]           # (B*S, FF)
    hdn = hdn * jax.nn.sigmoid(1.702 * hdn)                               # QuickGELU
    mlp = jnp.dot(hdn.astype(jnp.bfloat16), w_proj_t[0],
                  preferred_element_type=jnp.float32) + b_proj[0]         # (B*S, D)
    x = x + mlp.reshape(B, S, D)

    x_carry[...] = x

    @pl.when(l == pl.num_programs(0) - 1)
    def _():
        o_ref[...] = x.astype(o_ref.dtype)


def run_transformer(x, stacked):
    in_arrays = [
        x,
        stacked['ln1_w'], stacked['ln1_b'],
        stacked['w_in_t'], stacked['b_in'],
        stacked['w_out_t'], stacked['b_out'],
        stacked['ln2_w'], stacked['ln2_b'],
        stacked['w_fc_t'], stacked['b_fc'],
        stacked['w_proj_t'], stacked['b_proj'],
    ]

    x_spec = pl.BlockSpec((B, S, D), lambda l: (0, 0, 0))   # resident across layers

    def layer_spec(a):
        # one layer slab per grid step; last two dims are full array dims
        return pl.BlockSpec((1,) + a.shape[1:], lambda l: (l, 0, 0))

    grid_spec = pltpu.PrefetchScalarGridSpec(
        num_scalar_prefetch=0,
        grid=(L,),
        in_specs=[x_spec] + [layer_spec(a) for a in in_arrays[1:]],
        out_specs=pl.BlockSpec((B, S, D), lambda l: (0, 0, 0)),
        scratch_shapes=[pltpu.VMEM((B, S, D), jnp.float32)],
    )
    return pl.pallas_call(
        transformer_kernel,
        out_shape=jax.ShapeDtypeStruct((B, S, D), jnp.float32),
        grid_spec=grid_spec,
        compiler_params=pltpu.CompilerParams(
            dimension_semantics=("arbitrary",)),     # layer axis is a carried reduction
    )(*in_arrays)


# --------------------------------------------------------------------------------------
# Pallas kernel 2: final head
#   x = ln_final(x); x = x[arange(B), text.argmax(-1)] @ text_projection
# EOT gather done with an in-kernel iota one-hot masked reduction (no dynamic slices,
# no OOB risk, no SMEM scalar reads on the vector path).
# --------------------------------------------------------------------------------------
def head_kernel(x_ref, eot_ref, lnf_w, lnf_b, proj_ref, o_ref):
    x = x_ref[...]                                                        # (B, S, D) f32
    pos = jax.lax.broadcasted_iota(jnp.int32, (B, S, D), 1)
    onehot = (pos == eot_ref[...]).astype(jnp.float32)                    # (B,1,1) -> (B,S,D)
    xr = jnp.sum(x * onehot, axis=1)                                      # (B, D) EOT rows
    xn = _layer_norm(xr, lnf_w[...], lnf_b[...])
    o_ref[...] = jnp.dot(xn.astype(jnp.bfloat16),
                         proj_ref[...].astype(jnp.bfloat16),
                         preferred_element_type=jnp.float32).astype(o_ref.dtype)


def run_head(x, eot_idx, lnf_w, lnf_b, proj):
    eot = eot_idx.reshape(B, 1, 1).astype(jnp.int32)
    arrays = [x, eot, lnf_w, lnf_b, proj]

    def full_spec(a):
        nd = a.ndim
        return pl.BlockSpec(a.shape, lambda i, _nd=nd: (0,) * _nd)

    grid_spec = pltpu.PrefetchScalarGridSpec(
        num_scalar_prefetch=0,
        grid=(1,),
        in_specs=[full_spec(a) for a in arrays],
        out_specs=pl.BlockSpec((B, E), lambda i: (0, 0)),
    )
    return pl.pallas_call(
        head_kernel,
        out_shape=jax.ShapeDtypeStruct((B, E), jnp.float32),
        grid_spec=grid_spec,
    )(*arrays)


# --------------------------------------------------------------------------------------
# Parameters (deterministic synthetic init, PyTorch-shaped, pre-transposed + stacked)
# --------------------------------------------------------------------------------------
def init_clip_text_params(key):
    keys = iter(jax.random.split(key, 8 + 8 * L))

    def nrm(shape, std=0.02):
        return std * jax.random.normal(next(keys), shape, jnp.float32)

    layers = []
    for _ in range(L):
        layers.append({
            'ln1_w': jnp.ones((1, D), jnp.float32),
            'ln1_b': jnp.zeros((1, D), jnp.float32),
            'w_in': nrm((3 * D, D)),  'b_in': nrm((1, 3 * D)),
            'w_out': nrm((D, D)),     'b_out': nrm((1, D)),
            'ln2_w': jnp.ones((1, D), jnp.float32),
            'ln2_b': jnp.zeros((1, D), jnp.float32),
            'w_fc': nrm((FF, D)),     'b_fc': nrm((1, FF)),
            'w_proj': nrm((D, FF)),   'b_proj': nrm((1, D)),
        })

    def stack(name):
        return jnp.stack([lp[name] for lp in layers], axis=0)            # (L, 1, dim) f32

    def stack_t(name):
        # PyTorch (out_features, in_features) -> (in, out), bf16 for the MXU, once at init
        return jnp.stack([lp[name].T for lp in layers], axis=0).astype(jnp.bfloat16)

    stacked = {
        'ln1_w': stack('ln1_w'), 'ln1_b': stack('ln1_b'),
        'w_in_t': stack_t('w_in'), 'b_in': stack('b_in'),
        'w_out_t': stack_t('w_out'), 'b_out': stack('b_out'),
        'ln2_w': stack('ln2_w'), 'ln2_b': stack('ln2_b'),
        'w_fc_t': stack_t('w_fc'), 'b_fc': stack('b_fc'),
        'w_proj_t': stack_t('w_proj'), 'b_proj': stack('b_proj'),
    }

    params = {
        'token_embedding': nrm((V, D)),
        'positional_embedding': nrm((S, D), std=0.01),
        'lnf_w': jnp.ones((1, D), jnp.float32),
        'lnf_b': jnp.zeros((1, D), jnp.float32),
        'text_projection': nrm((D, E), std=D ** -0.5),
        'stacked': stacked,
    }
    return params


def text_clip_forward(params, text):
    # token embedding lookup + positional embedding add (plain JAX glue)
    x = params['token_embedding'][text].astype(jnp.float32)              # (B, S, D)
    x = x + params['positional_embedding'][None, :, :]

    # transformer: all L residual-attention blocks in one fused Pallas call
    x = run_transformer(x, params['stacked'])

    # ln_final + EOT gather + text_projection (Pallas head kernel)
    eot_idx = jnp.argmax(text, axis=-1).astype(jnp.int32)                # (B,)
    return run_head(x, eot_idx, params['lnf_w'], params['lnf_b'],
                    params['text_projection'])


if __name__ == "__main__":
    key = jax.random.PRNGKey(0)
    pkey, tkey = jax.random.split(key)
    params = init_clip_text_params(pkey)
    text = jax.random.randint(tkey, (B, S), 0, V, dtype=jnp.int32)       # (2, 8) token ids

    out = text_clip_forward(params, text)
    out = jax.block_until_ready(out)
    assert out.shape == (B, E) and out.dtype == jnp.float32
    assert bool(jnp.all(jnp.isfinite(out)))
    print("KERNEL_OK")
</pallas_src>

<mosaic_0001>
module attributes {stable_mosaic.version = 11 : i64} {
  func.func @transformer_kernel(%arg0: i32, %arg1: memref<2x8x32xf32, #tpu.memory_space<vmem>>, %arg2: memref<1x1x32xf32, #tpu.memory_space<vmem>>, %arg3: memref<1x1x32xf32, #tpu.memory_space<vmem>>, %arg4: memref<1x32x96xbf16, #tpu.memory_space<vmem>>, %arg5: memref<1x1x96xf32, #tpu.memory_space<vmem>>, %arg6: memref<1x32x32xbf16, #tpu.memory_space<vmem>>, %arg7: memref<1x1x32xf32, #tpu.memory_space<vmem>>, %arg8: memref<1x1x32xf32, #tpu.memory_space<vmem>>, %arg9: memref<1x1x32xf32, #tpu.memory_space<vmem>>, %arg10: memref<1x32x128xbf16, #tpu.memory_space<vmem>>, %arg11: memref<1x1x128xf32, #tpu.memory_space<vmem>>, %arg12: memref<1x128x32xbf16, #tpu.memory_space<vmem>>, %arg13: memref<1x1x32xf32, #tpu.memory_space<vmem>>, %arg14: memref<2x8x32xf32, #tpu.memory_space<vmem>>, %arg15: memref<2x8x32xf32, #tpu.memory_space<vmem>>) attributes {dimension_semantics = [#tpu.dimension_semantics<arbitrary>], iteration_bounds = array<i64: 2>, scalar_prefetch = 0 : i64, scratch_operands = 1 : i64, tpu.core_type = #tpu.core_type<tc>, window_params = [{pipeline_mode = #tpu.pipeline_mode<synchronous>, transform_indices = @transform_0, window_bounds = array<i64: 2, 8, 32>}, {transform_indices = @transform_1, window_bounds = array<i64: 1, 1, 32>}, {transform_indices = @transform_2, window_bounds = array<i64: 1, 1, 32>}, {transform_indices = @transform_3, window_bounds = array<i64: 1, 32, 96>}, {transform_indices = @transform_4, window_bounds = array<i64: 1, 1, 96>}, {transform_indices = @transform_5, window_bounds = array<i64: 1, 32, 32>}, {transform_indices = @transform_6, window_bounds = array<i64: 1, 1, 32>}, {transform_indices = @transform_7, window_bounds = array<i64: 1, 1, 32>}, {transform_indices = @transform_8, window_bounds = array<i64: 1, 1, 32>}, {transform_indices = @transform_9, window_bounds = array<i64: 1, 32, 128>}, {transform_indices = @transform_10, window_bounds = array<i64: 1, 1, 128>}, {transform_indices = @transform_11, window_bounds = array<i64: 1, 128, 32>}, {transform_indices = @transform_12, window_bounds = array<i64: 1, 1, 32>}, {pipeline_mode = #tpu.pipeline_mode<synchronous>, transform_indices = @transform_13, window_bounds = array<i64: 2, 8, 32>}]} {
    %c0_i32 = arith.constant 0 : i32
    %0 = arith.cmpi eq, %arg0, %c0_i32 : i32
    %1 = arith.extui %0 : i1 to i32
    %c0_i32_0 = arith.constant 0 : i32
    %2 = arith.cmpi ne, %1, %c0_i32_0 : i32
    scf.if %2 {
      %c0_64 = arith.constant 0 : index
      %c0_65 = arith.constant 0 : index
      %c0_66 = arith.constant 0 : index
      %160 = vector.load %arg1[%c0_64, %c0_65, %c0_66] : memref<2x8x32xf32, #tpu.memory_space<vmem>>, vector<2x8x32xf32>
      %c0_67 = arith.constant 0 : index
      %c0_68 = arith.constant 0 : index
      %c0_69 = arith.constant 0 : index
      %161 = vector.load %arg15[%c0_67, %c0_68, %c0_69] : memref<2x8x32xf32, #tpu.memory_space<vmem>>, vector<2x8x32xf32>
      tpu.vector_store %arg15[%c0_67, %c0_68, %c0_69], %160 {strides = array<i32>} : memref<2x8x32xf32, #tpu.memory_space<vmem>>, vector<2x8x32xf32>,
    } else {
    }
    %c0 = arith.constant 0 : index
    %c0_1 = arith.constant 0 : index
    %c0_2 = arith.constant 0 : index
    %3 = vector.load %arg15[%c0, %c0_1, %c0_2] : memref<2x8x32xf32, #tpu.memory_space<vmem>>, vector<2x8x32xf32>
    %c0_3 = arith.constant 0 : index
    %c0_4 = arith.constant 0 : index
    %c0_5 = arith.constant 0 : index
    %4 = vector.load %arg2[%c0_3, %c0_4, %c0_5] : memref<1x1x32xf32, #tpu.memory_space<vmem>>, vector<1x1x32xf32>
    %5 = vector.shape_cast %4 : vector<1x1x32xf32> to vector<1x32xf32>
    %c0_6 = arith.constant 0 : index
    %c0_7 = arith.constant 0 : index
    %c0_8 = arith.constant 0 : index
    %6 = vector.load %arg3[%c0_6, %c0_7, %c0_8] : memref<1x1x32xf32, #tpu.memory_space<vmem>>, vector<1x1x32xf32>
    %7 = vector.shape_cast %6 : vector<1x1x32xf32> to vector<1x32xf32>
    %cst = arith.constant dense<0.000000e+00> : vector<2x8xf32>
    %8 = vector.multi_reduction <add>, %3, %cst [2] : vector<2x8x32xf32> to vector<2x8xf32>
    %9 = vector.shape_cast %8 : vector<2x8xf32> to vector<2x8x1xf32>
    %cst_9 = arith.constant 3.200000e+01 : f32
    %10 = vector.broadcast %cst_9 : f32 to vector<2x8x1xf32>
    %11 = arith.divf %9, %10 : vector<2x8x1xf32>
    %12 = vector.broadcast %11 : vector<2x8x1xf32> to vector<2x8x32xf32>
    %13 = arith.subf %3, %12 : vector<2x8x32xf32>
    %14 = arith.mulf %13, %13 : vector<2x8x32xf32>
    %cst_10 = arith.constant dense<0.000000e+00> : vector<2x8xf32>
    %15 = vector.multi_reduction <add>, %14, %cst_10 [2] : vector<2x8x32xf32> to vector<2x8xf32>
    %16 = vector.shape_cast %15 : vector<2x8xf32> to vector<2x8x1xf32>
    %cst_11 = arith.constant 3.200000e+01 : f32
    %17 = vector.broadcast %cst_11 : f32 to vector<2x8x1xf32>
    %18 = arith.divf %16, %17 : vector<2x8x1xf32>
    %19 = vector.broadcast %11 : vector<2x8x1xf32> to vector<2x8x32xf32>
    %20 = arith.subf %3, %19 : vector<2x8x32xf32>
    %cst_12 = arith.constant 9.99999974E-6 : f32
    %21 = vector.broadcast %cst_12 : f32 to vector<2x8x1xf32>
    %22 = arith.addf %18, %21 : vector<2x8x1xf32>
    %23 = math.rsqrt %22 : vector<2x8x1xf32>
    %24 = vector.broadcast %23 : vector<2x8x1xf32> to vector<2x8x32xf32>
    %25 = arith.mulf %20, %24 : vector<2x8x32xf32>
    %26 = vector.shape_cast %5 : vector<1x32xf32> to vector<1x1x32xf32>
    %27 = vector.broadcast %26 : vector<1x1x32xf32> to vector<2x8x32xf32>
    %28 = arith.mulf %25, %27 : vector<2x8x32xf32>
    %29 = vector.shape_cast %7 : vector<1x32xf32> to vector<1x1x32xf32>
    %30 = vector.broadcast %29 : vector<1x1x32xf32> to vector<2x8x32xf32>
    %31 = arith.addf %28, %30 : vector<2x8x32xf32>
    %32 = vector.shape_cast %31 : vector<2x8x32xf32> to vector<16x32xf32>
    %33 = arith.truncf %32 : vector<16x32xf32> to vector<16x32xbf16>
    %c0_13 = arith.constant 0 : index
    %c0_14 = arith.constant 0 : index
    %c0_15 = arith.constant 0 : index
    %34 = vector.load %arg4[%c0_13, %c0_14, %c0_15] : memref<1x32x96xbf16, #tpu.memory_space<vmem>>, vector<1x32x96xbf16>
    %35 = vector.shape_cast %34 : vector<1x32x96xbf16> to vector<32x96xbf16>
    %cst_16 = arith.constant dense<0.000000e+00> : vector<16x96xf32>
    %36 = tpu.matmul %33, %35, %cst_16 {dimension_numbers = #tpu.dot_dimension_numbers<[1], [0], [0], [1], [0, 0, 1, 1], [], []>} : vector<16x32xbf16>, vector<32x96xbf16>, vector<16x96xf32> -> vector<16x96xf32>
    %c0_17 = arith.constant 0 : index
    %c0_18 = arith.constant 0 : index
    %c0_19 = arith.constant 0 : index
    %37 = vector.load %arg5[%c0_17, %c0_18, %c0_19] : memref<1x1x96xf32, #tpu.memory_space<vmem>>, vector<1x1x96xf32>
    %38 = vector.shape_cast %37 : vector<1x1x96xf32> to vector<1x96xf32>
    %39 = vector.broadcast %38 : vector<1x96xf32> to vector<16x96xf32>
    %40 = arith.addf %36, %39 : vector<16x96xf32>
    %41 = vector.extract_strided_slice %40 {offsets = [0, 0], sizes = [16, 32], strides = [1, 1]} : vector<16x96xf32> to vector<16x32xf32>
    %cst_20 = arith.constant 0.353553385 : f32
    %42 = vector.broadcast %cst_20 : f32 to vector<16x32xf32>
    %43 = arith.mulf %41, %42 : vector<16x32xf32>
    %44 = vector.shape_cast %43 : vector<16x32xf32> to vector<2x8x32xf32>
    %45 = vector.extract_strided_slice %40 {offsets = [0, 32], sizes = [16, 32], strides = [1, 1]} : vector<16x96xf32> to vector<16x32xf32>
    %46 = vector.shape_cast %45 : vector<16x32xf32> to vector<2x8x32xf32>
    %47 = vector.extract_strided_slice %40 {offsets = [0, 64], sizes = [16, 32], strides = [1, 1]} : vector<16x96xf32> to vector<16x32xf32>
    %48 = vector.shape_cast %47 : vector<16x32xf32> to vector<2x8x32xf32>
    %49 = vector.extract_strided_slice %44 {offsets = [0, 0, 0], sizes = [2, 8, 8], strides = [1, 1, 1]} : vector<2x8x32xf32> to vector<2x8x8xf32>
    %50 = vector.extract_strided_slice %44 {offsets = [0, 0, 8], sizes = [2, 8, 8], strides = [1, 1, 1]} : vector<2x8x32xf32> to vector<2x8x8xf32>
    %51 = vector.extract_strided_slice %44 {offsets = [0, 0, 16], sizes = [2, 8, 8], strides = [1, 1, 1]} : vector<2x8x32xf32> to vector<2x8x8xf32>
    %52 = vector.extract_strided_slice %44 {offsets = [0, 0, 24], sizes = [2, 8, 8], strides = [1, 1, 1]} : vector<2x8x32xf32> to vector<2x8x8xf32>
    %53 = tpu.concatenate %49, %50, %51, %52 in 0 : vector<2x8x8xf32>, vector<2x8x8xf32>, vector<2x8x8xf32>, vector<2x8x8xf32> -> vector<8x8x8xf32>
    %54 = vector.extract_strided_slice %46 {offsets = [0, 0, 0], sizes = [2, 8, 8], strides = [1, 1, 1]} : vector<2x8x32xf32> to vector<2x8x8xf32>
    %55 = vector.extract_strided_slice %46 {offsets = [0, 0, 8], sizes = [2, 8, 8], strides = [1, 1, 1]} : vector<2x8x32xf32> to vector<2x8x8xf32>
    %56 = vector.extract_strided_slice %46 {offsets = [0, 0, 16], sizes = [2, 8, 8], strides = [1, 1, 1]} : vector<2x8x32xf32> to vector<2x8x8xf32>
    %57 = vector.extract_strided_slice %46 {offsets = [0, 0, 24], sizes = [2, 8, 8], strides = [1, 1, 1]} : vector<2x8x32xf32> to vector<2x8x8xf32>
    %58 = tpu.concatenate %54, %55, %56, %57 in 0 : vector<2x8x8xf32>, vector<2x8x8xf32>, vector<2x8x8xf32>, vector<2x8x8xf32> -> vector<8x8x8xf32>
    %59 = vector.extract_strided_slice %48 {offsets = [0, 0, 0], sizes = [2, 8, 8], strides = [1, 1, 1]} : vector<2x8x32xf32> to vector<2x8x8xf32>
    %60 = vector.extract_strided_slice %48 {offsets = [0, 0, 8], sizes = [2, 8, 8], strides = [1, 1, 1]} : vector<2x8x32xf32> to vector<2x8x8xf32>
    %61 = vector.extract_strided_slice %48 {offsets = [0, 0, 16], sizes = [2, 8, 8], strides = [1, 1, 1]} : vector<2x8x32xf32> to vector<2x8x8xf32>
    %62 = vector.extract_strided_slice %48 {offsets = [0, 0, 24], sizes = [2, 8, 8], strides = [1, 1, 1]} : vector<2x8x32xf32> to vector<2x8x8xf32>
    %63 = tpu.concatenate %59, %60, %61, %62 in 0 : vector<2x8x8xf32>, vector<2x8x8xf32>, vector<2x8x8xf32>, vector<2x8x8xf32> -> vector<8x8x8xf32>
    %64 = arith.truncf %53 : vector<8x8x8xf32> to vector<8x8x8xbf16>
    %65 = arith.truncf %58 : vector<8x8x8xf32> to vector<8x8x8xbf16>
    "tpu.trace_start"() <{level = 10 : i32, message = "bsd,btd->bst"}> : () -> ()
    %cst_21 = arith.constant dense<0.000000e+00> : vector<8x8x8xf32>
    %66 = tpu.matmul %64, %65, %cst_21 {dimension_numbers = #tpu.dot_dimension_numbers<[2], [2], [1], [1], [0, 0, 0, 1, 1, 1], [0], [0]>} : vector<8x8x8xbf16>, vector<8x8x8xbf16>, vector<8x8x8xf32> -> vector<8x8x8xf32>
    "tpu.trace_stop"() : () -> ()
    %67 = tpu.iota {dimensions = array<i32: 1>} : vector<8x8x8xi32>
    %68 = tpu.iota {dimensions = array<i32: 2>} : vector<8x8x8xi32>
    %69 = arith.cmpi sgt, %68, %67 : vector<8x8x8xi32>
    %cst_22 = arith.constant -1.000000e+09 : f32
    %70 = vector.broadcast %cst_22 : f32 to vector<8x8x8xf32>
    %71 = arith.select %69, %70, %66 : vector<8x8x8xi1>, vector<8x8x8xf32>
    %cst_23 = arith.constant dense<0xFF800000> : vector<8x8xf32>
    %72 = vector.multi_reduction <maximumf>, %71, %cst_23 [2] : vector<8x8x8xf32> to vector<8x8xf32>
    %73 = vector.shape_cast %72 : vector<8x8xf32> to vector<8x8x1xf32>
    %74 = vector.broadcast %73 : vector<8x8x1xf32> to vector<8x8x8xf32>
    %75 = arith.subf %71, %74 : vector<8x8x8xf32>
    %76 = math.exp %75 : vector<8x8x8xf32>
    %cst_24 = arith.constant dense<0.000000e+00> : vector<8x8xf32>
    %77 = vector.multi_reduction <add>, %76, %cst_24 [2] : vector<8x8x8xf32> to vector<8x8xf32>
    %78 = vector.shape_cast %77 : vector<8x8xf32> to vector<8x8x1xf32>
    %79 = tpu.reciprocal %78 {approx = true} : vector<8x8x1xf32> -> vector<8x8x1xf32>
    %80 = vector.broadcast %79 : vector<8x8x1xf32> to vector<8x8x8xf32>
    %81 = arith.mulf %76, %80 : vector<8x8x8xf32>
    %82 = arith.truncf %81 : vector<8x8x8xf32> to vector<8x8x8xbf16>
    %83 = arith.truncf %63 : vector<8x8x8xf32> to vector<8x8x8xbf16>
    "tpu.trace_start"() <{level = 10 : i32, message = "bst,btd->bsd"}> : () -> ()
    %cst_25 = arith.constant dense<0.000000e+00> : vector<8x8x8xf32>
    %84 = tpu.matmul %82, %83, %cst_25 {dimension_numbers = #tpu.dot_dimension_numbers<[2], [1], [1], [2], [0, 0, 0, 1, 1, 2], [0], [0]>} : vector<8x8x8xbf16>, vector<8x8x8xbf16>, vector<8x8x8xf32> -> vector<8x8x8xf32>
    "tpu.trace_stop"() : () -> ()
    %85 = vector.extract_strided_slice %84 {offsets = [0, 0, 0], sizes = [2, 8, 8], strides = [1, 1, 1]} : vector<8x8x8xf32> to vector<2x8x8xf32>
    %86 = vector.extract_strided_slice %84 {offsets = [2, 0, 0], sizes = [2, 8, 8], strides = [1, 1, 1]} : vector<8x8x8xf32> to vector<2x8x8xf32>
    %87 = vector.extract_strided_slice %84 {offsets = [4, 0, 0], sizes = [2, 8, 8], strides = [1, 1, 1]} : vector<8x8x8xf32> to vector<2x8x8xf32>
    %88 = vector.extract_strided_slice %84 {offsets = [6, 0, 0], sizes = [2, 8, 8], strides = [1, 1, 1]} : vector<8x8x8xf32> to vector<2x8x8xf32>
    %89 = tpu.concatenate %85, %86, %87, %88 in 2 : vector<2x8x8xf32>, vector<2x8x8xf32>, vector<2x8x8xf32>, vector<2x8x8xf32> -> vector<2x8x32xf32>
    %90 = vector.shape_cast %89 : vector<2x8x32xf32> to vector<16x32xf32>
    %91 = arith.truncf %90 : vector<16x32xf32> to vector<16x32xbf16>
    %c0_26 = arith.constant 0 : index
    %c0_27 = arith.constant 0 : index
    %c0_28 = arith.constant 0 : index
    %92 = vector.load %arg6[%c0_26, %c0_27, %c0_28] : memref<1x32x32xbf16, #tpu.memory_space<vmem>>, vector<1x32x32xbf16>
    %93 = vector.shape_cast %92 : vector<1x32x32xbf16> to vector<32x32xbf16>
    %cst_29 = arith.constant dense<0.000000e+00> : vector<16x32xf32>
    %94 = tpu.matmul %91, %93, %cst_29 {dimension_numbers = #tpu.dot_dimension_numbers<[1], [0], [0], [1], [0, 0, 1, 1], [], []>} : vector<16x32xbf16>, vector<32x32xbf16>, vector<16x32xf32> -> vector<16x32xf32>
    %c0_30 = arith.constant 0 : index
    %c0_31 = arith.constant 0 : index
    %c0_32 = arith.constant 0 : index
    %95 = vector.load %arg7[%c0_30, %c0_31, %c0_32] : memref<1x1x32xf32, #tpu.memory_space<vmem>>, vector<1x1x32xf32>
    %96 = vector.shape_cast %95 : vector<1x1x32xf32> to vector<1x32xf32>
    %97 = vector.broadcast %96 : vector<1x32xf32> to vector<16x32xf32>
    %98 = arith.addf %94, %97 : vector<16x32xf32>
    %99 = vector.shape_cast %98 : vector<16x32xf32> to vector<2x8x32xf32>
    %100 = arith.addf %3, %99 : vector<2x8x32xf32>
    %c0_33 = arith.constant 0 : index
    %c0_34 = arith.constant 0 : index
    %c0_35 = arith.constant 0 : index
    %101 = vector.load %arg8[%c0_33, %c0_34, %c0_35] : memref<1x1x32xf32, #tpu.memory_space<vmem>>, vector<1x1x32xf32>
    %102 = vector.shape_cast %101 : vector<1x1x32xf32> to vector<1x32xf32>
    %c0_36 = arith.constant 0 : index
    %c0_37 = arith.constant 0 : index
    %c0_38 = arith.constant 0 : index
    %103 = vector.load %arg9[%c0_36, %c0_37, %c0_38] : memref<1x1x32xf32, #tpu.memory_space<vmem>>, vector<1x1x32xf32>
    %104 = vector.shape_cast %103 : vector<1x1x32xf32> to vector<1x32xf32>
    %cst_39 = arith.constant dense<0.000000e+00> : vector<2x8xf32>
    %105 = vector.multi_reduction <add>, %100, %cst_39 [2] : vector<2x8x32xf32> to vector<2x8xf32>
    %106 = vector.shape_cast %105 : vector<2x8xf32> to vector<2x8x1xf32>
    %cst_40 = arith.constant 3.200000e+01 : f32
    %107 = vector.broadcast %cst_40 : f32 to vector<2x8x1xf32>
    %108 = arith.divf %106, %107 : vector<2x8x1xf32>
    %109 = vector.broadcast %108 : vector<2x8x1xf32> to vector<2x8x32xf32>
    %110 = arith.subf %100, %109 : vector<2x8x32xf32>
    %111 = arith.mulf %110, %110 : vector<2x8x32xf32>
    %cst_41 = arith.constant dense<0.000000e+00> : vector<2x8xf32>
    %112 = vector.multi_reduction <add>, %111, %cst_41 [2] : vector<2x8x32xf32> to vector<2x8xf32>
    %113 = vector.shape_cast %112 : vector<2x8xf32> to vector<2x8x1xf32>
    %cst_42 = arith.constant 3.200000e+01 : f32
    %114 = vector.broadcast %cst_42 : f32 to vector<2x8x1xf32>
    %115 = arith.divf %113, %114 : vector<2x8x1xf32>
    %116 = vector.broadcast %108 : vector<2x8x1xf32> to vector<2x8x32xf32>
    %117 = arith.subf %100, %116 : vector<2x8x32xf32>
    %cst_43 = arith.constant 9.99999974E-6 : f32
    %118 = vector.broadcast %cst_43 : f32 to vector<2x8x1xf32>
    %119 = arith.addf %115, %118 : vector<2x8x1xf32>
    %120 = math.rsqrt %119 : vector<2x8x1xf32>
    %121 = vector.broadcast %120 : vector<2x8x1xf32> to vector<2x8x32xf32>
    %122 = arith.mulf %117, %121 : vector<2x8x32xf32>
    %123 = vector.shape_cast %102 : vector<1x32xf32> to vector<1x1x32xf32>
    %124 = vector.broadcast %123 : vector<1x1x32xf32> to vector<2x8x32xf32>
    %125 = arith.mulf %122, %124 : vector<2x8x32xf32>
    %126 = vector.shape_cast %104 : vector<1x32xf32> to vector<1x1x32xf32>
    %127 = vector.broadcast %126 : vector<1x1x32xf32> to vector<2x8x32xf32>
    %128 = arith.addf %125, %127 : vector<2x8x32xf32>
    %129 = vector.shape_cast %128 : vector<2x8x32xf32> to vector<16x32xf32>
    %130 = arith.truncf %129 : vector<16x32xf32> to vector<16x32xbf16>
    %c0_44 = arith.constant 0 : index
    %c0_45 = arith.constant 0 : index
    %c0_46 = arith.constant 0 : index
    %131 = vector.load %arg10[%c0_44, %c0_45, %c0_46] : memref<1x32x128xbf16, #tpu.memory_space<vmem>>, vector<1x32x128xbf16>
    %132 = vector.shape_cast %131 : vector<1x32x128xbf16> to vector<32x128xbf16>
    %cst_47 = arith.constant dense<0.000000e+00> : vector<16x128xf32>
    %133 = tpu.matmul %130, %132, %cst_47 {dimension_numbers = #tpu.dot_dimension_numbers<[1], [0], [0], [1], [0, 0, 1, 1], [], []>} : vector<16x32xbf16>, vector<32x128xbf16>, vector<16x128xf32> -> vector<16x128xf32>
    %c0_48 = arith.constant 0 : index
    %c0_49 = arith.constant 0 : index
    %c0_50 = arith.constant 0 : index
    %134 = vector.load %arg11[%c0_48, %c0_49, %c0_50] : memref<1x1x128xf32, #tpu.memory_space<vmem>>, vector<1x1x128xf32>
    %135 = vector.shape_cast %134 : vector<1x1x128xf32> to vector<1x128xf32>
    %136 = vector.broadcast %135 : vector<1x128xf32> to vector<16x128xf32>
    %137 = arith.addf %133, %136 : vector<16x128xf32>
    %cst_51 = arith.constant 1.702000e+00 : f32
    %138 = vector.broadcast %cst_51 : f32 to vector<16x128xf32>
    %139 = arith.mulf %138, %137 : vector<16x128xf32>
    %140 = arith.negf %139 : vector<16x128xf32>
    %141 = math.exp %140 : vector<16x128xf32>
    %cst_52 = arith.constant 1.000000e+00 : f32
    %142 = vector.broadcast %cst_52 : f32 to vector<16x128xf32>
    %143 = arith.addf %142, %141 : vector<16x128xf32>
    %144 = arith.divf %142, %143 : vector<16x128xf32>
    %145 = arith.mulf %137, %144 : vector<16x128xf32>
    %146 = arith.truncf %145 : vector<16x128xf32> to vector<16x128xbf16>
    %c0_53 = arith.constant 0 : index
    %c0_54 = arith.constant 0 : index
    %c0_55 = arith.constant 0 : index
    %147 = vector.load %arg12[%c0_53, %c0_54, %c0_55] : memref<1x128x32xbf16, #tpu.memory_space<vmem>>, vector<1x128x32xbf16>
    %148 = vector.shape_cast %147 : vector<1x128x32xbf16> to vector<128x32xbf16>
    %cst_56 = arith.constant dense<0.000000e+00> : vector<16x32xf32>
    %149 = tpu.matmul %146, %148, %cst_56 {dimension_numbers = #tpu.dot_dimension_numbers<[1], [0], [0], [1], [0, 0, 1, 1], [], []>} : vector<16x128xbf16>, vector<128x32xbf16>, vector<16x32xf32> -> vector<16x32xf32>
    %c0_57 = arith.constant 0 : index
    %c0_58 = arith.constant 0 : index
    %c0_59 = arith.constant 0 : index
    %150 = vector.load %arg13[%c0_57, %c0_58, %c0_59] : memref<1x1x32xf32, #tpu.memory_space<vmem>>, vector<1x1x32xf32>
    %151 = vector.shape_cast %150 : vector<1x1x32xf32> to vector<1x32xf32>
    %152 = vector.broadcast %151 : vector<1x32xf32> to vector<16x32xf32>
    %153 = arith.addf %149, %152 : vector<16x32xf32>
    %154 = vector.shape_cast %153 : vector<16x32xf32> to vector<2x8x32xf32>
    %155 = arith.addf %100, %154 : vector<2x8x32xf32>
    %c0_60 = arith.constant 0 : index
    %c0_61 = arith.constant 0 : index
    %c0_62 = arith.constant 0 : index
    %156 = vector.load %arg15[%c0_60, %c0_61, %c0_62] : memref<2x8x32xf32, #tpu.memory_space<vmem>>, vector<2x8x32xf32>
    tpu.vector_store %arg15[%c0_60, %c0_61, %c0_62], %155 {strides = array<i32>} : memref<2x8x32xf32, #tpu.memory_space<vmem>>, vector<2x8x32xf32>,
    %c1_i32 = arith.constant 1 : i32
    %157 = arith.cmpi eq, %arg0, %c1_i32 : i32
    %158 = arith.extui %157 : i1 to i32
    %c0_i32_63 = arith.constant 0 : i32
    %159 = arith.cmpi ne, %158, %c0_i32_63 : i32
    scf.if %159 {
      %c0_64 = arith.constant 0 : index
      %c0_65 = arith.constant 0 : index
      %c0_66 = arith.constant 0 : index
      %160 = vector.load %arg14[%c0_64, %c0_65, %c0_66] : memref<2x8x32xf32, #tpu.memory_space<vmem>>, vector<2x8x32xf32>
      tpu.vector_store %arg14[%c0_64, %c0_65, %c0_66], %155 {strides = array<i32>} : memref<2x8x32xf32, #tpu.memory_space<vmem>>, vector<2x8x32xf32>,
    } else {
    }
    return
  }
  func.func @transform_0(%arg0: i32) -> (i32, i32, i32) {
    %c0_i32 = arith.constant 0 : i32
    %c0_i32_0 = arith.constant 0 : i32
    %c0_i32_1 = arith.constant 0 : i32
    %c0_i32_2 = arith.constant 0 : i32
    return %c0_i32, %c0_i32_0, %c0_i32_1 : i32, i32, i32
  }
  func.func @transform_1(%arg0: i32) -> (i32, i32, i32) {
    %c0_i32 = arith.constant 0 : i32
    %c0_i32_0 = arith.constant 0 : i32
    %c0_i32_1 = arith.constant 0 : i32
    return %arg0, %c0_i32, %c0_i32_0 : i32, i32, i32
  }
  func.func @transform_2(%arg0: i32) -> (i32, i32, i32) {
    %c0_i32 = arith.constant 0 : i32
    %c0_i32_0 = arith.constant 0 : i32
    %c0_i32_1 = arith.constant 0 : i32
    return %arg0, %c0_i32, %c0_i32_0 : i32, i32, i32
  }
  func.func @transform_3(%arg0: i32) -> (i32, i32, i32) {
    %c0_i32 = arith.constant 0 : i32
    %c0_i32_0 = arith.constant 0 : i32
    %c0_i32_1 = arith.constant 0 : i32
    return %arg0, %c0_i32, %c0_i32_0 : i32, i32, i32
  }
  func.func @transform_4(%arg0: i32) -> (i32, i32, i32) {
    %c0_i32 = arith.constant 0 : i32
    %c0_i32_0 = arith.constant 0 : i32
    %c0_i32_1 = arith.constant 0 : i32
    return %arg0, %c0_i32, %c0_i32_0 : i32, i32, i32
  }
  func.func @transform_5(%arg0: i32) -> (i32, i32, i32) {
    %c0_i32 = arith.constant 0 : i32
    %c0_i32_0 = arith.constant 0 : i32
    %c0_i32_1 = arith.constant 0 : i32
    return %arg0, %c0_i32, %c0_i32_0 : i32, i32, i32
  }
  func.func @transform_6(%arg0: i32) -> (i32, i32, i32) {
    %c0_i32 = arith.constant 0 : i32
    %c0_i32_0 = arith.constant 0 : i32
    %c0_i32_1 = arith.constant 0 : i32
    return %arg0, %c0_i32, %c0_i32_0 : i32, i32, i32
  }
  func.func @transform_7(%arg0: i32) -> (i32, i32, i32) {
    %c0_i32 = arith.constant 0 : i32
    %c0_i32_0 = arith.constant 0 : i32
    %c0_i32_1 = arith.constant 0 : i32
    return %arg0, %c0_i32, %c0_i32_0 : i32, i32, i32
  }
  func.func @transform_8(%arg0: i32) -> (i32, i32, i32) {
    %c0_i32 = arith.constant 0 : i32
    %c0_i32_0 = arith.constant 0 : i32
    %c0_i32_1 = arith.constant 0 : i32
    return %arg0, %c0_i32, %c0_i32_0 : i32, i32, i32
  }
  func.func @transform_9(%arg0: i32) -> (i32, i32, i32) {
    %c0_i32 = arith.constant 0 : i32
    %c0_i32_0 = arith.constant 0 : i32
    %c0_i32_1 = arith.constant 0 : i32
    return %arg0, %c0_i32, %c0_i32_0 : i32, i32, i32
  }
  func.func @transform_10(%arg0: i32) -> (i32, i32, i32) {
    %c0_i32 = arith.constant 0 : i32
    %c0_i32_0 = arith.constant 0 : i32
    %c0_i32_1 = arith.constant 0 : i32
    return %arg0, %c0_i32, %c0_i32_0 : i32, i32, i32
  }
  func.func @transform_11(%arg0: i32) -> (i32, i32, i32) {
    %c0_i32 = arith.constant 0 : i32
    %c0_i32_0 = arith.constant 0 : i32
    %c0_i32_1 = arith.constant 0 : i32
    return %arg0, %c0_i32, %c0_i32_0 : i32, i32, i32
  }
  func.func @transform_12(%arg0: i32) -> (i32, i32, i32) {
    %c0_i32 = arith.constant 0 : i32
    %c0_i32_0 = arith.constant 0 : i32
    %c0_i32_1 = arith.constant 0 : i32
    return %arg0, %c0_i32, %c0_i32_0 : i32, i32, i32
  }
  func.func @transform_13(%arg0: i32) -> (i32, i32, i32) {
    %c0_i32 = arith.constant 0 : i32
    %c0_i32_0 = arith.constant 0 : i32
    %c0_i32_1 = arith.constant 0 : i32
    %c0_i32_2 = arith.constant 0 : i32
    return %c0_i32, %c0_i32_0, %c0_i32_1 : i32, i32, i32
  }
}

</mosaic_0001>

<llo_original>
// kernel: tpu_custom_call.1
$region0: #{tpu_custom_call.1}
  #allocation0 [shape = 'u32[]', space=smem, size = 0x4, offset = 0x4, fixed_abs, tag = 'smem constant byte address 0x4 - core index']
  #allocation1 [shape = 'u32[144,128]{1,0:T(1,128)}', space=vmem, size = 0x12000, scoped, tag = 'internal scratch']
  #allocation2 [shape = 'f32[2,8,32]{2,1,0:T(8,128)}', space=vmem, size = 0x2000, scoped, tag = 'scratch operand']
  %s0 = inlined_call_operand.vmem [shape: f32[2,8,32], index: 0, kind: input, shape index: {}]
  %s1 = inlined_call_operand.vmem [shape: f32[2,1,32], index: 1, kind: input, shape index: {}]
  %s2 = inlined_call_operand.vmem [shape: f32[2,1,32], index: 2, kind: input, shape index: {}]
  %s3 = inlined_call_operand.vmem [shape: bf16[2,32,96], index: 3, kind: input, shape index: {}]
  %s4 = inlined_call_operand.vmem [shape: f32[2,1,96], index: 4, kind: input, shape index: {}]
  %s5 = inlined_call_operand.vmem [shape: bf16[2,32,32], index: 5, kind: input, shape index: {}]
  %s6 = inlined_call_operand.vmem [shape: f32[2,1,32], index: 6, kind: input, shape index: {}]
  %s7 = inlined_call_operand.vmem [shape: f32[2,1,32], index: 7, kind: input, shape index: {}]
  %s8 = inlined_call_operand.vmem [shape: f32[2,1,32], index: 8, kind: input, shape index: {}]
  %s9 = inlined_call_operand.vmem [shape: bf16[2,32,128], index: 9, kind: input, shape index: {}]
  %s10 = inlined_call_operand.vmem [shape: f32[2,1,128], index: 10, kind: input, shape index: {}]
  %s11 = inlined_call_operand.vmem [shape: bf16[2,128,32], index: 11, kind: input, shape index: {}]
  %s12 = inlined_call_operand.vmem [shape: f32[2,1,32], index: 12, kind: input, shape index: {}]
  %s13 = inlined_call_operand.hbm [shape: f32[2,8,32], index: 13, kind: output, shape index: {}]
  %s14 = sld [smem:[#allocation0]]
  $region93: #{tpu_custom_call.1} parent=0
    _
  %s16 = ssub.s32 1, %s14
  %s17 = scalar_select 0, %s16, %s14
  $region1: #{tpu_custom_call.1} parent=0
    #allocation3 [shape = 'u8[8192]{0}', space=vmem, size = 0x2000, scoped, tag = 'output window, operand 0, single buffered']
    #allocation4 [shape = 's32[2]{0}', space=sflag, size = 0x8, scoped, tag = 'scoped memory for tpu_custom_call.1']
    %18 = vsyncpa [#allocation4], 0
    loop: start=0, step=1, limit=4
    $region2: #{tpu_custom_call.1} parent=1 // loop_pre_header
      _
    $region3: #{tpu_custom_call.1} parent=1 // loop_header
      %s20 = sphi 0, %s24
      %p21 = scmp.ge.s32.totalorder %s20, 4
      %s28 = sphi 0, %s28
      %s30 = sphi 0, %s28
      %s31 = sphi 0, %s30
      %s45 = sphi 0, %s31
      %s51 = sphi 0, %s53
      %s54 = sphi 0, %s51
      %s55 = sphi 0, %s54
      %s71 = sphi 0, %s55
      %s77 = sphi 0, %s79
      %s80 = sphi 0, %s77
      %s81 = sphi 0, %s80
      %s97 = sphi 0, %s81
      %s103 = sphi 0, %s105
      %s106 = sphi 0, %s103
      %s107 = sphi 0, %s106
      %s123 = sphi 0, %s107
      %s129 = sphi 0, %s131
      %s132 = sphi 0, %s129
      %s133 = sphi 0, %s132
      %s149 = sphi 0, %s133
      %s155 = sphi 0, %s157
      %s158 = sphi 0, %s155
      %s159 = sphi 0, %s158
      %s175 = sphi 0, %s159
      %s181 = sphi 0, %s183
      %s184 = sphi 0, %s181
      %s185 = sphi 0, %s184
      %s201 = sphi 0, %s185
      %s207 = sphi 0, %s209
      %s210 = sphi 0, %s207
      %s211 = sphi 0, %s210
      %s227 = sphi 0, %s211
      %s233 = sphi 0, %s235
      %s236 = sphi 0, %s233
      %s237 = sphi 0, %s236
      %s253 = sphi 0, %s237
      %s259 = sphi 0, %s261
      %s262 = sphi 0, %s259
      %s263 = sphi 0, %s262
      %s279 = sphi 0, %s263
      %s285 = sphi 0, %s287
      %s288 = sphi 0, %s285
      %s289 = sphi 0, %s288
      %s305 = sphi 0, %s289
      %s311 = sphi 0, %s313
      %s314 = sphi 0, %s311
      %s315 = sphi 0, %s314
      %s331 = sphi 0, %s315
      %s337 = sphi 0, %s339
      %s340 = sphi 0, %s337
      %s341 = sphi 0, %s340
      %s357 = sphi 0, %s341
      %s361 = sphi 0, %s361
      %s363 = sphi 0, %s361
      %s364 = sphi 0, %s363
      %s378 = sphi 0, %s364
    $region4: #{tpu_custom_call.1} parent=1 // loop_header_branch
      %23 = sbr.rel (%p21) target = $region8
    $region5: #{tpu_custom_call.1} parent=1 // loop_body
      %s25 = ssub.s32 %s20, 1
      %s26 = ssub.s32 %s20, 2
      %s27 = sadd.s32 %s20, 1
      %s29 = sadd.s32 %s28, 1
      %p32 = scmp.eq.s32.totalorder %s20, 1
      %p33 = scmp.ne.s32.totalorder %s28, %s30
      %p34 = scmp.eq.s32.totalorder %s20, 0
      %p35 = por %p33, %p34
      %p36 = scmp.ne.s32.totalorder %s28, %s30
      %p37 = scmp.eq.s32.totalorder %s25, 1
      %p38 = por %p36, %p37
      %p39 = scmp.ne.s32.totalorder %s30, %s31
      %p40 = scmp.eq.s32.totalorder %s25, 0
      %p41 = por %p39, %p40
      %p42 = scmp.ne.s32.totalorder %s30, %s31
      %p43 = scmp.eq.s32.totalorder %s26, 1
      %p44 = por %p42, %p43
      %p46 = scmp.ne.s32.totalorder %s31, %s45
      %p47 = scmp.eq.s32.totalorder %s26, 0
      %p48 = por %p46, %p47
      %s49 = ssub.s32 %s20, %s27
      %p50 = scmp.eq.s32.totalorder %s49, 0
      %s52 = sadd.s32 %s51, 1
      %s53 = scalar_select %p50, %s51, %s52
      %p56 = pneg %p50
      %p57 = scmp.eq.s32.totalorder %s20, 1
      %p58 = por %p56, %p57
      %p59 = scmp.ne.s32.totalorder %s51, %s54
      %p60 = scmp.eq.s32.totalorder %s20, 0
      %p61 = por %p59, %p60
      %p62 = scmp.ne.s32.totalorder %s51, %s54
      %p63 = scmp.eq.s32.totalorder %s25, 1
      %p64 = por %p62, %p63
      %p65 = scmp.ne.s32.totalorder %s54, %s55
      %p66 = scmp.eq.s32.totalorder %s25, 0
      %p67 = por %p65, %p66
      %p68 = scmp.ne.s32.totalorder %s54, %s55
      %p69 = scmp.eq.s32.totalorder %s26, 1
      %p70 = por %p68, %p69
      %p72 = scmp.ne.s32.totalorder %s55, %s71
      %p73 = scmp.eq.s32.totalorder %s26, 0
      %p74 = por %p72, %p73
      %s75 = ssub.s32 %s20, %s27
      %p76 = scmp.eq.s32.totalorder %s75, 0
      %s78 = sadd.s32 %s77, 1
      %s79 = scalar_select %p76, %s77, %s78
      %p82 = pneg %p76
      %p83 = scmp.eq.s32.totalorder %s20, 1
      %p84 = por %p82, %p83
      %p85 = scmp.ne.s32.totalorder %s77, %s80
      %p86 = scmp.eq.s32.totalorder %s20, 0
      %p87 = por %p85, %p86
      %p88 = scmp.ne.s32.totalorder %s77, %s80
      %p89 = scmp.eq.s32.totalorder %s25, 1
      %p90 = por %p88, %p89
      %p91 = scmp.ne.s32.totalorder %s80, %s81
      %p92 = scmp.eq.s32.totalorder %s25, 0
      %p93 = por %p91, %p92
      %p94 = scmp.ne.s32.totalorder %s80, %s81
      %p95 = scmp.eq.s32.totalorder %s26, 1
      %p96 = por %p94, %p95
      %p98 = scmp.ne.s32.totalorder %s81, %s97
      %p99 = scmp.eq.s32.totalorder %s26, 0
      %p100 = por %p98, %p99
      %s101 = ssub.s32 %s20, %s27
      %p102 = scmp.eq.s32.totalorder %s101, 0
      %s104 = sadd.s32 %s103, 1
      %s105 = scalar_select %p102, %s103, %s104
      %p108 = pneg %p102
      %p109 = scmp.eq.s32.totalorder %s20, 1
      %p110 = por %p108, %p109
      %p111 = scmp.ne.s32.totalorder %s103, %s106
      %p112 = scmp.eq.s32.totalorder %s20, 0
      %p113 = por %p111, %p112
      %p114 = scmp.ne.s32.totalorder %s103, %s106
      %p115 = scmp.eq.s32.totalorder %s25, 1
      %p116 = por %p114, %p115
      %p117 = scmp.ne.s32.totalorder %s106, %s107
      %p118 = scmp.eq.s32.totalorder %s25, 0
      %p119 = por %p117, %p118
      %p120 = scmp.ne.s32.totalorder %s106, %s107
      %p121 = scmp.eq.s32.totalorder %s26, 1
      %p122 = por %p120, %p121
      %p124 = scmp.ne.s32.totalorder %s107, %s123
      %p125 = scmp.eq.s32.totalorder %s26, 0
      %p126 = por %p124, %p125
      %s127 = ssub.s32 %s20, %s27
      %p128 = scmp.eq.s32.totalorder %s127, 0
      %s130 = sadd.s32 %s129, 1
      %s131 = scalar_select %p128, %s129, %s130
      %p134 = pneg %p128
      %p135 = scmp.eq.s32.totalorder %s20, 1
      %p136 = por %p134, %p135
      %p137 = scmp.ne.s32.totalorder %s129, %s132
      %p138 = scmp.eq.s32.totalorder %s20, 0
      %p139 = por %p137, %p138
      %p140 = scmp.ne.s32.totalorder %s129, %s132
      %p141 = scmp.eq.s32.totalorder %s25, 1
      %p142 = por %p140, %p141
      %p143 = scmp.ne.s32.totalorder %s132, %s133
      %p144 = scmp.eq.s32.totalorder %s25, 0
      %p145 = por %p143, %p144
      %p146 = scmp.ne.s32.totalorder %s132, %s133
      %p147 = scmp.eq.s32.totalorder %s26, 1
      %p148 = por %p146, %p147
      %p150 = scmp.ne.s32.totalorder %s133, %s149
      %p151 = scmp.eq.s32.totalorder %s26, 0
      %p152 = por %p150, %p151
      %s153 = ssub.s32 %s20, %s27
      %p154 = scmp.eq.s32.totalorder %s153, 0
      %s156 = sadd.s32 %s155, 1
      %s157 = scalar_select %p154, %s155, %s156
      %p160 = pneg %p154
      %p161 = scmp.eq.s32.totalorder %s20, 1
      %p162 = por %p160, %p161
      %p163 = scmp.ne.s32.totalorder %s155, %s158
      %p164 = scmp.eq.s32.totalorder %s20, 0
      %p165 = por %p163, %p164
      %p166 = scmp.ne.s32.totalorder %s155, %s158
      %p167 = scmp.eq.s32.totalorder %s25, 1
      %p168 = por %p166, %p167
      %p169 = scmp.ne.s32.totalorder %s158, %s159
      %p170 = scmp.eq.s32.totalorder %s25, 0
      %p171 = por %p169, %p170
      %p172 = scmp.ne.s32.totalorder %s158, %s159
      %p173 = scmp.eq.s32.totalorder %s26, 1
      %p174 = por %p172, %p173
      %p176 = scmp.ne.s32.totalorder %s159, %s175
      %p177 = scmp.eq.s32.totalorder %s26, 0
      %p178 = por %p176, %p177
      %s179 = ssub.s32 %s20, %s27
      %p180 = scmp.eq.s32.totalorder %s179, 0
      %s182 = sadd.s32 %s181, 1
      %s183 = scalar_select %p180, %s181, %s182
      %p186 = pneg %p180
      %p187 = scmp.eq.s32.totalorder %s20, 1
      %p188 = por %p186, %p187
      %p189 = scmp.ne.s32.totalorder %s181, %s184
      %p190 = scmp.eq.s32.totalorder %s20, 0
      %p191 = por %p189, %p190
      %p192 = scmp.ne.s32.totalorder %s181, %s184
      %p193 = scmp.eq.s32.totalorder %s25, 1
      %p194 = por %p192, %p193
      %p195 = scmp.ne.s32.totalorder %s184, %s185
      %p196 = scmp.eq.s32.totalorder %s25, 0
      %p197 = por %p195, %p196
      %p198 = scmp.ne.s32.totalorder %s184, %s185
      %p199 = scmp.eq.s32.totalorder %s26, 1
      %p200 = por %p198, %p199
      %p202 = scmp.ne.s32.totalorder %s185, %s201
      %p203 = scmp.eq.s32.totalorder %s26, 0
      %p204 = por %p202, %p203
      %s205 = ssub.s32 %s20, %s27
      %p206 = scmp.eq.s32.totalorder %s205, 0
      %s208 = sadd.s32 %s207, 1
      %s209 = scalar_select %p206, %s207, %s208
      %p212 = pneg %p206
      %p213 = scmp.eq.s32.totalorder %s20, 1
      %p214 = por %p212, %p213
      %p215 = scmp.ne.s32.totalorder %s207, %s210
      %p216 = scmp.eq.s32.totalorder %s20, 0
      %p217 = por %p215, %p216
      %p218 = scmp.ne.s32.totalorder %s207, %s210
      %p219 = scmp.eq.s32.totalorder %s25, 1
      %p220 = por %p218, %p219
      %p221 = scmp.ne.s32.totalorder %s210, %s211
      %p222 = scmp.eq.s32.totalorder %s25, 0
      %p223 = por %p221, %p222
      %p224 = scmp.ne.s32.totalorder %s210, %s211
      %p225 = scmp.eq.s32.totalorder %s26, 1
      %p226 = por %p224, %p225
      %p228 = scmp.ne.s32.totalorder %s211, %s227
      %p229 = scmp.eq.s32.totalorder %s26, 0
      %p230 = por %p228, %p229
      %s231 = ssub.s32 %s20, %s27
      %p232 = scmp.eq.s32.totalorder %s231, 0
      %s234 = sadd.s32 %s233, 1
      %s235 = scalar_select %p232, %s233, %s234
      %p238 = pneg %p232
      %p239 = scmp.eq.s32.totalorder %s20, 1
      %p240 = por %p238, %p239
      %p241 = scmp.ne.s32.totalorder %s233, %s236
      %p242 = scmp.eq.s32.totalorder %s20, 0
      %p243 = por %p241, %p242
      %p244 = scmp.ne.s32.totalorder %s233, %s236
      %p245 = scmp.eq.s32.totalorder %s25, 1
      %p246 = por %p244, %p245
      %p247 = scmp.ne.s32.totalorder %s236, %s237
      %p248 = scmp.eq.s32.totalorder %s25, 0
      %p249 = por %p247, %p248
      %p250 = scmp.ne.s32.totalorder %s236, %s237
      %p251 = scmp.eq.s32.totalorder %s26, 1
      %p252 = por %p250, %p251
      %p254 = scmp.ne.s32.totalorder %s237, %s253
      %p255 = scmp.eq.s32.totalorder %s26, 0
      %p256 = por %p254, %p255
      %s257 = ssub.s32 %s20, %s27
      %p258 = scmp.eq.s32.totalorder %s257, 0
      %s260 = sadd.s32 %s259, 1
      %s261 = scalar_select %p258, %s259, %s260
      %p264 = pneg %p258
      %p265 = scmp.eq.s32.totalorder %s20, 1
      %p266 = por %p264, %p265
      %p267 = scmp.ne.s32.totalorder %s259, %s262
      %p268 = scmp.eq.s32.totalorder %s20, 0
      %p269 = por %p267, %p268
      %p270 = scmp.ne.s32.totalorder %s259, %s262
      %p271 = scmp.eq.s32.totalorder %s25, 1
      %p272 = por %p270, %p271
      %p273 = scmp.ne.s32.totalorder %s262, %s263
      %p274 = scmp.eq.s32.totalorder %s25, 0
      %p275 = por %p273, %p274
      %p276 = scmp.ne.s32.totalorder %s262, %s263
      %p277 = scmp.eq.s32.totalorder %s26, 1
      %p278 = por %p276, %p277
      %p280 = scmp.ne.s32.totalorder %s263, %s279
      %p281 = scmp.eq.s32.totalorder %s26, 0
      %p282 = por %p280, %p281
      %s283 = ssub.s32 %s20, %s27
      %p284 = scmp.eq.s32.totalorder %s283, 0
      %s286 = sadd.s32 %s285, 1
      %s287 = scalar_select %p284, %s285, %s286
      %p290 = pneg %p284
      %p291 = scmp.eq.s32.totalorder %s20, 1
      %p292 = por %p290, %p291
      %p293 = scmp.ne.s32.totalorder %s285, %s288
      %p294 = scmp.eq.s32.totalorder %s20, 0
      %p295 = por %p293, %p294
      %p296 = scmp.ne.s32.totalorder %s285, %s288
      %p297 = scmp.eq.s32.totalorder %s25, 1
      %p298 = por %p296, %p297
      %p299 = scmp.ne.s32.totalorder %s288, %s289
      %p300 = scmp.eq.s32.totalorder %s25, 0
      %p301 = por %p299, %p300
      %p302 = scmp.ne.s32.totalorder %s288, %s289
      %p303 = scmp.eq.s32.totalorder %s26, 1
      %p304 = por %p302, %p303
      %p306 = scmp.ne.s32.totalorder %s289, %s305
      %p307 = scmp.eq.s32.totalorder %s26, 0
      %p308 = por %p306, %p307
      %s309 = ssub.s32 %s20, %s27
      %p310 = scmp.eq.s32.totalorder %s309, 0
      %s312 = sadd.s32 %s311, 1
      %s313 = scalar_select %p310, %s311, %s312
      %p316 = pneg %p310
      %p317 = scmp.eq.s32.totalorder %s20, 1
      %p318 = por %p316, %p317
      %p319 = scmp.ne.s32.totalorder %s311, %s314
      %p320 = scmp.eq.s32.totalorder %s20, 0
      %p321 = por %p319, %p320
      %p322 = scmp.ne.s32.totalorder %s311, %s314
      %p323 = scmp.eq.s32.totalorder %s25, 1
      %p324 = por %p322, %p323
      %p325 = scmp.ne.s32.totalorder %s314, %s315
      %p326 = scmp.eq.s32.totalorder %s25, 0
      %p327 = por %p325, %p326
      %p328 = scmp.ne.s32.totalorder %s314, %s315
      %p329 = scmp.eq.s32.totalorder %s26, 1
      %p330 = por %p328, %p329
      %p332 = scmp.ne.s32.totalorder %s315, %s331
      %p333 = scmp.eq.s32.totalorder %s26, 0
      %p334 = por %p332, %p333
      %s335 = ssub.s32 %s20, %s27
      %p336 = scmp.eq.s32.totalorder %s335, 0
      %s338 = sadd.s32 %s337, 1
      %s339 = scalar_select %p336, %s337, %s338
      %p342 = pneg %p336
      %p343 = scmp.eq.s32.totalorder %s20, 1
      %p344 = por %p342, %p343
      %p345 = scmp.ne.s32.totalorder %s337, %s340
      %p346 = scmp.eq.s32.totalorder %s20, 0
      %p347 = por %p345, %p346
      %p348 = scmp.ne.s32.totalorder %s337, %s340
      %p349 = scmp.eq.s32.totalorder %s25, 1
      %p350 = por %p348, %p349
      %p351 = scmp.ne.s32.totalorder %s340, %s341
      %p352 = scmp.eq.s32.totalorder %s25, 0
      %p353 = por %p351, %p352
      %p354 = scmp.ne.s32.totalorder %s340, %s341
      %p355 = scmp.eq.s32.totalorder %s26, 1
      %p356 = por %p354, %p355
      %p358 = scmp.ne.s32.totalorder %s341, %s357
      %p359 = scmp.eq.s32.totalorder %s26, 0
      %p360 = por %p358, %p359
      %s362 = sadd.s32 %s361, 1
      %p365 = scmp.eq.s32.totalorder %s20, 1
      %p366 = scmp.ne.s32.totalorder %s361, %s363
      %p367 = scmp.eq.s32.totalorder %s20, 0
      %p368 = por %p366, %p367
      %p369 = scmp.ne.s32.totalorder %s361, %s363
      %p370 = scmp.eq.s32.totalorder %s25, 1
      %p371 = por %p369, %p370
      %p372 = scmp.ne.s32.totalorder %s363, %s364
      %p373 = scmp.eq.s32.totalorder %s25, 0
      %p374 = por %p372, %p373
      %p375 = scmp.ne.s32.totalorder %s363, %s364
      %p376 = scmp.eq.s32.totalorder %s26, 1
      %p377 = por %p375, %p376
      %p379 = scmp.ne.s32.totalorder %s364, %s378
      %p380 = scmp.eq.s32.totalorder %s26, 0
      %p381 = por %p379, %p380
      %p382 = scmp.le.s32.totalorder 1, %s20
      %p383 = scmp.lt.s32.totalorder %s20, 3
      %p384 = pnand %p382, %p383
      %p385 = pneg %p384
      // Predicated region
      $region9: #{tpu_custom_call.1} parent=5 // pred_check
        _
      $region10: #{tpu_custom_call.1} parent=5 // pred_check_branch
        %387 = sbr.rel (%p384) target = $region12
      $region11: #{tpu_custom_call.1} parent=5 // pred_region
        %s388 = ssub.s32 %s20, 1
        // Predicated region
        $region13: #{tpu_custom_call.1} parent=11 // pred_check
          %p389 = pneg %p41
        $region14: #{tpu_custom_call.1} parent=11 // pred_check_branch
          %391 = sbr.rel (%p389) target = $region16
        $region15: #{tpu_custom_call.1} parent=11 // pred_region
          _
        $region16: #{tpu_custom_call.1} parent=11 // pred_fallthru
          _
      $region12: #{tpu_custom_call.1} parent=5 // pred_fallthru
        _
      %p392 = scmp.lt.s32.totalorder %s20, 2
      // Predicated region
      $region17: #{tpu_custom_call.1} parent=5 // pred_check
        %p393 = pneg %p392
      $region18: #{tpu_custom_call.1} parent=5 // pred_check_branch
        %395 = sbr.rel (%p393) target = $region20
      $region19: #{tpu_custom_call.1} parent=5 // pred_region
        // Predicated region
        $region21: #{tpu_custom_call.1} parent=19 // pred_check
          %p396 = pneg %p61
        $region22: #{tpu_custom_call.1} parent=19 // pred_check_branch
          %398 = sbr.rel (%p396) target = $region24
        $region23: #{tpu_custom_call.1} parent=19 // pred_region
          %p399 = scmp.lt.s32.totalorder %s20, 1
          %s400 = scalar_select %p399, %s20, 1
          %s401 = scalar_lea.vmem %s1, %s400
        $region24: #{tpu_custom_call.1} parent=19 // pred_fallthru
          _
        // Predicated region
        $region25: #{tpu_custom_call.1} parent=19 // pred_check
          %p402 = pneg %p87
        $region26: #{tpu_custom_call.1} parent=19 // pred_check_branch
          %404 = sbr.rel (%p402) target = $region28
        $region27: #{tpu_custom_call.1} parent=19 // pred_region
          %p405 = scmp.lt.s32.totalorder %s20, 1
          %s406 = scalar_select %p405, %s20, 1
          %s407 = scalar_lea.vmem %s2, %s406
        $region28: #{tpu_custom_call.1} parent=19 // pred_fallthru
          _
        // Predicated region
        $region29: #{tpu_custom_call.1} parent=19 // pred_check
          %p408 = pneg %p113
        $region30: #{tpu_custom_call.1} parent=19 // pred_check_branch
          %410 = sbr.rel (%p408) target = $region32
        $region31: #{tpu_custom_call.1} parent=19 // pred_region
          %p411 = scmp.lt.s32.totalorder %s20, 1
          %s412 = scalar_select %p411, %s20, 1
          %s413 = smul.addr %s412, 4
          %s414 = smul.addr %s413, 4
          %s415 = scalar_lea.vmem %s3, %s414
        $region32: #{tpu_custom_call.1} parent=19 // pred_fallthru
          _
        // Predicated region
        $region33: #{tpu_custom_call.1} parent=19 // pred_check
          %p416 = pneg %p139
        $region34: #{tpu_custom_call.1} parent=19 // pred_check_branch
          %418 = sbr.rel (%p416) target = $region36
        $region35: #{tpu_custom_call.1} parent=19 // pred_region
          %p419 = scmp.lt.s32.totalorder %s20, 1
          %s420 = scalar_select %p419, %s20, 1
          %s421 = scalar_lea.vmem %s4, %s420
        $region36: #{tpu_custom_call.1} parent=19 // pred_fallthru
          _
        // Predicated region
        $region37: #{tpu_custom_call.1} parent=19 // pred_check
          %p422 = pneg %p165
        $region38: #{tpu_custom_call.1} parent=19 // pred_check_branch
          %424 = sbr.rel (%p422) target = $region40
        $region39: #{tpu_custom_call.1} parent=19 // pred_region
          %p425 = scmp.lt.s32.totalorder %s20, 1
          %s426 = scalar_select %p425, %s20, 1
          %s427 = smul.addr %s426, 4
          %s428 = smul.addr %s427, 4
          %s429 = scalar_lea.vmem %s5, %s428
        $region40: #{tpu_custom_call.1} parent=19 // pred_fallthru
          _
        // Predicated region
        $region41: #{tpu_custom_call.1} parent=19 // pred_check
          %p430 = pneg %p191
        $region42: #{tpu_custom_call.1} parent=19 // pred_check_branch
          %432 = sbr.rel (%p430) target = $region44
        $region43: #{tpu_custom_call.1} parent=19 // pred_region
          %p433 = scmp.lt.s32.totalorder %s20, 1
          %s434 = scalar_select %p433, %s20, 1
          %s435 = scalar_lea.vmem %s6, %s434
        $region44: #{tpu_custom_call.1} parent=19 // pred_fallthru
          _
        // Predicated region
        $region45: #{tpu_custom_call.1} parent=19 // pred_check
          %p436 = pneg %p217
        $region46: #{tpu_custom_call.1} parent=19 // pred_check_branch
          %438 = sbr.rel (%p436) target = $region48
        $region47: #{tpu_custom_call.1} parent=19 // pred_region
          %p439 = scmp.lt.s32.totalorder %s20, 1
          %s440 = scalar_select %p439, %s20, 1
          %s441 = scalar_lea.vmem %s7, %s440
        $region48: #{tpu_custom_call.1} parent=19 // pred_fallthru
          _
        // Predicated region
        $region49: #{tpu_custom_call.1} parent=19 // pred_check
          %p442 = pneg %p243
        $region50: #{tpu_custom_call.1} parent=19 // pred_check_branch
          %444 = sbr.rel (%p442) target = $region52
        $region51: #{tpu_custom_call.1} parent=19 // pred_region
          %p445 = scmp.lt.s32.totalorder %s20, 1
          %s446 = scalar_select %p445, %s20, 1
          %s447 = scalar_lea.vmem %s8, %s446
        $region52: #{tpu_custom_call.1} parent=19 // pred_fallthru
          _
        // Predicated region
        $region53: #{tpu_custom_call.1} parent=19 // pred_check
          %p448 = pneg %p269
        $region54: #{tpu_custom_call.1} parent=19 // pred_check_branch
          %450 = sbr.rel (%p448) target = $region56
        $region55: #{tpu_custom_call.1} parent=19 // pred_region
          %p451 = scmp.lt.s32.totalorder %s20, 1
          %s452 = scalar_select %p451, %s20, 1
          %s453 = smul.addr %s452, 4
          %s454 = smul.addr %s453, 4
          %s455 = scalar_lea.vmem %s9, %s454
        $region56: #{tpu_custom_call.1} parent=19 // pred_fallthru
          _
        // Predicated region
        $region57: #{tpu_custom_call.1} parent=19 // pred_check
          %p456 = pneg %p295
        $region58: #{tpu_custom_call.1} parent=19 // pred_check_branch
          %458 = sbr.rel (%p456) target = $region60
        $region59: #{tpu_custom_call.1} parent=19 // pred_region
          %p459 = scmp.lt.s32.totalorder %s20, 1
          %s460 = scalar_select %p459, %s20, 1
          %s461 = scalar_lea.vmem %s10, %s460
        $region60: #{tpu_custom_call.1} parent=19 // pred_fallthru
          _
        // Predicated region
        $region61: #{tpu_custom_call.1} parent=19 // pred_check
          %p462 = pneg %p321
        $region62: #{tpu_custom_call.1} parent=19 // pred_check_branch
          %464 = sbr.rel (%p462) target = $region64
        $region63: #{tpu_custom_call.1} parent=19 // pred_region
          %p465 = scmp.lt.s32.totalorder %s20, 1
          %s466 = scalar_select %p465, %s20, 1
          %s467 = smul.addr %s466, 16
          %s468 = smul.addr %s467, 4
          %s469 = scalar_lea.vmem %s11, %s468
        $region64: #{tpu_custom_call.1} parent=19 // pred_fallthru
          _
        // Predicated region
        $region65: #{tpu_custom_call.1} parent=19 // pred_check
          %p470 = pneg %p347
        $region66: #{tpu_custom_call.1} parent=19 // pred_check_branch
          %472 = sbr.rel (%p470) target = $region68
        $region67: #{tpu_custom_call.1} parent=19 // pred_region
          %p473 = scmp.lt.s32.totalorder %s20, 1
          %s474 = scalar_select %p473, %s20, 1
          %s475 = scalar_lea.vmem %s12, %s474
        $region68: #{tpu_custom_call.1} parent=19 // pred_fallthru
          _
      $region20: #{tpu_custom_call.1} parent=5 // pred_fallthru
        _
      %p476 = scmp.le.s32.totalorder 1, %s20
      %p477 = scmp.lt.s32.totalorder %s20, 3
      %p478 = pnand %p476, %p477
      %p479 = pneg %p478
      // Predicated region
      $region69: #{tpu_custom_call.1} parent=5 // pred_check
        _
      $region70: #{tpu_custom_call.1} parent=5 // pred_check_branch
        %481 = sbr.rel (%p478) target = $region72
      $region71: #{tpu_custom_call.1} parent=5 // pred_region
        %s482 = ssub.s32 %s20, 1
        %p483 = pneg %p41
        %p484 = pneg %p38
        %p485 = scmp.lt.s32.totalorder %s25, 1
        %s486 = scalar_select %p485, %s25, 1
        %s487 = scalar_lea.vmem %s1, %s486
        %p488 = pneg %p67
        %p489 = pneg %p64
        %p490 = scmp.lt.s32.totalorder %s25, 1
        %s491 = scalar_select %p490, %s25, 1
        %s492 = scalar_lea.vmem %s2, %s491
        %p493 = pneg %p93
        %p494 = pneg %p90
        %p495 = scmp.lt.s32.totalorder %s25, 1
        %s496 = scalar_select %p495, %s25, 1
        %s497 = smul.addr %s496, 4
        %s498 = smul.addr %s497, 4
        %s499 = scalar_lea.vmem %s3, %s498
        %p500 = pneg %p119
        %p501 = pneg %p116
        %p502 = scmp.lt.s32.totalorder %s25, 1
        %s503 = scalar_select %p502, %s25, 1
        %s504 = scalar_lea.vmem %s4, %s503
        %p505 = pneg %p145
        %p506 = pneg %p142
        %p507 = scmp.lt.s32.totalorder %s25, 1
        %s508 = scalar_select %p507, %s25, 1
        %s509 = smul.addr %s508, 4
        %s510 = smul.addr %s509, 4
        %s511 = scalar_lea.vmem %s5, %s510
        %p512 = pneg %p171
        %p513 = pneg %p168
        %p514 = scmp.lt.s32.totalorder %s25, 1
        %s515 = scalar_select %p514, %s25, 1
        %s516 = scalar_lea.vmem %s6, %s515
        %p517 = pneg %p197
        %p518 = pneg %p194
        %p519 = scmp.lt.s32.totalorder %s25, 1
        %s520 = scalar_select %p519, %s25, 1
        %s521 = scalar_lea.vmem %s7, %s520
        %p522 = pneg %p223
        %p523 = pneg %p220
        %p524 = scmp.lt.s32.totalorder %s25, 1
        %s525 = scalar_select %p524, %s25, 1
        %s526 = scalar_lea.vmem %s8, %s525
        %p527 = pneg %p249
        %p528 = pneg %p246
        %p529 = scmp.lt.s32.totalorder %s25, 1
        %s530 = scalar_select %p529, %s25, 1
        %s531 = smul.addr %s530, 4
        %s532 = smul.addr %s531, 4
        %s533 = scalar_lea.vmem %s9, %s532
        %p534 = pneg %p275
        %p535 = pneg %p272
        %p536 = scmp.lt.s32.totalorder %s25, 1
        %s537 = scalar_select %p536, %s25, 1
        %s538 = scalar_lea.vmem %s10, %s537
        %p539 = pneg %p301
        %p540 = pneg %p298
        %p541 = scmp.lt.s32.totalorder %s25, 1
        %s542 = scalar_select %p541, %s25, 1
        %s543 = smul.addr %s542, 16
        %s544 = smul.addr %s543, 4
        %s545 = scalar_lea.vmem %s11, %s544
        %p546 = pneg %p327
        %p547 = pneg %p324
        %p548 = scmp.lt.s32.totalorder %s25, 1
        %s549 = scalar_select %p548, %s25, 1
        %s550 = scalar_lea.vmem %s12, %s549
        %p551 = pneg %p353
        %p552 = pneg %p350
        %p553 = pneg %p374
        %p554 = pneg %p371
        %p555 = scmp.lt.s32.totalorder %s25, 1
        %s556 = scalar_select %p555, %s25, 1
        %s557 = scalar_lea.vmem %s1, %s556
        %p558 = scmp.lt.s32.totalorder %s25, 1
        %s559 = scalar_select %p558, %s25, 1
        %s560 = scalar_lea.vmem %s2, %s559
        %p561 = scmp.lt.s32.totalorder %s25, 1
        %s562 = scalar_select %p561, %s25, 1
        %s563 = smul.addr %s562, 4
        %s564 = smul.addr %s563, 4
        %s565 = scalar_lea.vmem %s3, %s564
        %p566 = scmp.lt.s32.totalorder %s25, 1
        %s567 = scalar_select %p566, %s25, 1
        %s568 = scalar_lea.vmem %s4, %s567
        %p569 = scmp.lt.s32.totalorder %s25, 1
        %s570 = scalar_select %p569, %s25, 1
        %s571 = smul.addr %s570, 4
        %s572 = smul.addr %s571, 4
        %s573 = scalar_lea.vmem %s5, %s572
        %p574 = scmp.lt.s32.totalorder %s25, 1
        %s575 = scalar_select %p574, %s25, 1
        %s576 = scalar_lea.vmem %s6, %s575
        %p577 = scmp.lt.s32.totalorder %s25, 1
        %s578 = scalar_select %p577, %s25, 1
        %s579 = scalar_lea.vmem %s7, %s578
        %p580 = scmp.lt.s32.totalorder %s25, 1
        %s581 = scalar_select %p580, %s25, 1
        %s582 = scalar_lea.vmem %s8, %s581
        %p583 = scmp.lt.s32.totalorder %s25, 1
        %s584 = scalar_select %p583, %s25, 1
        %s585 = smul.addr %s584, 4
        %s586 = smul.addr %s585, 4
        %s587 = scalar_lea.vmem %s9, %s586
        %p588 = scmp.lt.s32.totalorder %s25, 1
        %s589 = scalar_select %p588, %s25, 1
        %s590 = scalar_lea.vmem %s10, %s589
        %p591 = scmp.lt.s32.totalorder %s25, 1
        %s592 = scalar_select %p591, %s25, 1
        %s593 = smul.addr %s592, 16
        %s594 = smul.addr %s593, 4
        %s595 = scalar_lea.vmem %s11, %s594
        %p596 = scmp.lt.s32.totalorder %s25, 1
        %s597 = scalar_select %p596, %s25, 1
        %s598 = scalar_lea.vmem %s12, %s597
        %p600 = scmp.eq.s32.totalorder %s25, 0
        // Predicated region
        $region73: #{tpu_custom_call.1} parent=71 // pred_check
          %p601 = pneg %p600
        $region74: #{tpu_custom_call.1} parent=71 // pred_check_branch
          %603 = sbr.rel (%p601) target = $region76
        $region75: #{tpu_custom_call.1} parent=71 // pred_region
          %v604 = vld [vmem:[%s0] sm:$0xff]
          %v605 = vld [vmem:[%s0 + $0x8] sm:$0xff]
          %vm606 = vcmask 261120
          %607 = vst.msk [vmem:[#allocation2] sm:$0xff] %vm606, %v604
          %608 = vst.msk [vmem:[#allocation2 + $0x8] sm:$0xff] %vm606, %v605
        $region76: #{tpu_custom_call.1} parent=71 // pred_fallthru
          _
        %v609 = vld [vmem:[#allocation2] sm:$0xff]
        %v610 = vld [vmem:[#allocation2 + $0x8] sm:$0xff]
        %v611 = vld [vmem:[%s557] sm:$0x1]
        %v612 = vld [vmem:[%s560] sm:$0x1]
        %vm613 = vcmask 261120
        %v614 = vsel %vm613, %v609, 0.0
        %615 = vadd.xlane.f32.xlu0 %v614
        %v616 = vpop.xlane.xlu0 %615
        %v617 = vsel %vm613, %v610, 0.0
        %618 = vadd.xlane.f32.xlu0 %v617
        %v619 = vpop.xlane.xlu0 %618
        %v620 = vrcp.pop 32.0
        %v621 = vmul.f32 %v616, %v620
        %v622 = vmul.f32 %v619, %v620
        %v623 = vsub.f32 %v609, %v621
        %v624 = vsub.f32 %v610, %v622
        %v625 = vmul.f32 %v623, %v623
        %v626 = vmul.f32 %v624, %v624
        %v627 = vsel %vm613, %v625, 0.0
        %628 = vadd.xlane.f32.xlu0 %v627
        %v629 = vpop.xlane.xlu0 %628
        %v630 = vsel %vm613, %v626, 0.0
        %631 = vadd.xlane.f32.xlu0 %v630
        %v632 = vpop.xlane.xlu0 %631
        %v633 = vmul.f32 %v629, %v620
        %v634 = vmul.f32 %v632, %v620
        %v635 = vadd.f32 %v633, 1e-05
        %v636 = vadd.f32 %v634, 1e-05
        %v637 = vrsqrt.pop %v635
        %v638 = vrsqrt.pop %v636
        %v639 = vmul.f32 %v623, %v637
        %v640 = vmul.f32 %v624, %v638
        %v642 = vlaneseq
        %v643 = vshrl.u32 %v642, 7
        %v644 = vsub.s32 0, %v643
        %v645 = vrot.slane %v611, %v644
        %v647 = vmul.f32 %v639, %v645
        %v648 = vmul.f32 %v640, %v645
        %v650 = vlaneseq
        %v651 = vshrl.u32 %v650, 7
        %v652 = vsub.s32 0, %v651
        %v653 = vrot.slane %v612, %v652
        %v655 = vadd.f32 %v647, %v653
        %v656 = vadd.f32 %v648, %v653
        %v657 = vpack.c.bf16 %v656, %v655
        %v658 = vld [vmem:[%s565] sm:$0xf]
        %v659 = vld [vmem:[%s565 + $0x4] sm:$0xf]
        %v660 = vld [vmem:[%s565 + $0x8] sm:$0xf]
        %v661 = vld [vmem:[%s565 + $0xc] sm:$0xf]
        %v662 = vld [vmem:[%s568] sm:$0x1]
        %v664 = vlaneseq
        %v665 = vshrl.u32 %v664, 7
        %v666 = vsub.s32 0, %v665
        %v667 = vrot.slane %v662, %v666
        %v673 = vunpack.c.l.b16 %v658
        %v674 = vunpack.c.l.b16 %v659
        %v675 = vunpack.c.l.b16 %v660
        %v676 = vunpack.c.l.b16 %v661
        %v677 = vpack.c.b16 %v674, %v673
        %v678 = vpack.c.b16 %v676, %v675
        %v682 = vsel %vm613, %v657, 0
        %684 = vmatprep.subr.bf16.mxu0 0
        %685 = vmatpush1.bf16.msra.mxu0 %v677
        %686 = vmatprep.subr.bf16.mxu0 0
        %687 = vmatpush1.bf16.msra.mxu0 %v678
        %688 = vmatprep.subr.bf16.mxu0 0
        %689 = vmatpush1.bf16.msra.mxu0 0
        %690 = vmatprep.subr.bf16.mxu0 0
        %691 = vmatpush1.bf16.msra.mxu0 0
        %692 = vmatprep.subr.bf16.mxu0 0
        %693 = vmatpush1.bf16.msra.mxu0 0
        %694 = vmatprep.subr.bf16.mxu0 0
        %695 = vmatpush1.bf16.msra.mxu0 0
        %696 = vmatprep.subr.bf16.mxu0 0
        %697 = vmatpush1.bf16.msra.mxu0 0
        %698 = vmatprep.subr.bf16.mxu0 0
        %699 = vmatpush1.bf16.msra.mxu0 0
        %700 = vmatprep.subr.bf16.mxu0 0
        %701 = vmatpush1.bf16.msra.mxu0 0
        %702 = vmatprep.subr.bf16.mxu0 0
        %703 = vmatpush1.bf16.msra.mxu0 0
        %704 = vmatprep.subr.bf16.mxu0 0
        %705 = vmatpush1.bf16.msra.mxu0 0
        %706 = vmatprep.subr.bf16.mxu0 0
        %707 = vmatpush1.bf16.msra.mxu0 0
        %708 = vmatprep.subr.bf16.mxu0 0
        %709 = vmatpush1.bf16.msra.mxu0 0
        %710 = vmatprep.subr.bf16.mxu0 0
        %711 = vmatpush1.bf16.msra.mxu0 0
        %712 = vmatprep.subr.bf16.mxu0 0
        %713 = vmatpush1.bf16.msra.mxu0 0
        %714 = vmatprep.subr.bf16.mxu0 0
        %715 = vmatpush1.bf16.msra.mxu0 0
        %716 = vmatprep.mubr.bf16.mxu0 0
        %717 = vmatmul.mubr.bf16.gmra.mrb[0].mxu0 %v682
        %v718 = vpop.f32.mrb[0].mxu0
        %v719 = vadd.f32 %v667, %v718
        %v720 = vpop.f32.mrb[0].mxu0
        %v721 = vpop.f32.mrb[0].mxu0
        %v722 = vadd.f32 %v667, %v721
        %v723 = vpop.f32.mrb[0].mxu0
        %724 = vdwg.mxu0
        %v725 = vmul.f32 %v719, 0.35355338
        %v726 = vmul.f32 %v722, 0.35355338
        %729 = vrot.lane.b32.xlu0 %v725, 120
        %v730 = vpop.permute.xlu0 %729
        %731 = vrot.lane.b32.xlu0 %v726, 120
        %v732 = vpop.permute.xlu0 %731
        %735 = vrot.lane.b32.xlu0 %v725, 112
        %v736 = vpop.permute.xlu0 %735
        %737 = vrot.lane.b32.xlu0 %v726, 112
        %v738 = vpop.permute.xlu0 %737
        %741 = vrot.lane.b32.xlu0 %v725, 104
        %v742 = vpop.permute.xlu0 %741
        %743 = vrot.lane.b32.xlu0 %v726, 104
        %v744 = vpop.permute.xlu0 %743
        %749 = vrot.lane.b32.xlu0 %v719, 120
        %v750 = vpop.permute.xlu0 %749
        %751 = vrot.lane.b32.xlu0 %v722, 120
        %v752 = vpop.permute.xlu0 %751
        %755 = vrot.lane.b32.xlu0 %v719, 112
        %v756 = vpop.permute.xlu0 %755
        %757 = vrot.lane.b32.xlu0 %v722, 112
        %v758 = vpop.permute.xlu0 %757
        %761 = vrot.lane.b32.xlu0 %v719, 104
        %v762 = vpop.permute.xlu0 %761
        %763 = vrot.lane.b32.xlu0 %v722, 104
        %v764 = vpop.permute.xlu0 %763
        %v767 = vpack.c.bf16 %v725, %v725
        %v768 = vpack.c.bf16 %v726, %v726
        %v769 = vpack.c.bf16 %v730, %v730
        %v770 = vpack.c.bf16 %v732, %v732
        %v771 = vpack.c.bf16 %v736, %v736
        %v772 = vpack.c.bf16 %v738, %v738
        %v773 = vpack.c.bf16 %v742, %v742
        %v774 = vpack.c.bf16 %v744, %v744
        %v775 = vpack.c.bf16 %v719, %v719
        %v776 = vpack.c.bf16 %v722, %v722
        %v777 = vpack.c.bf16 %v750, %v750
        %v778 = vpack.c.bf16 %v752, %v752
        %v779 = vpack.c.bf16 %v756, %v756
        %v780 = vpack.c.bf16 %v758, %v758
        %v781 = vpack.c.bf16 %v762, %v762
        %v782 = vpack.c.bf16 %v764, %v764
        %784 = vrot.lane.b32.xlu0 %v775, 96
        %v785 = vpop.permute.xlu0 %784
        %vm786 = vcmask 64512
        %v788 = vsel %vm786, %v767, 0
        %v791 = vsel %vm786, %v785, 0
        %793 = vmatprep.subr.bf16.mxu0 0
        %794 = vmatpush1.bf16.xpose.msra.mxu0 %v791
        %795 = vmatprep.subr.bf16.mxu0 0
        %796 = vmatpush1.bf16.xpose.msra.mxu0 0
        %797 = vmatprep.subr.bf16.mxu0 0
        %798 = vmatpush1.bf16.xpose.msra.mxu0 0
        %799 = vmatprep.subr.bf16.mxu0 0
        %800 = vmatpush1.bf16.xpose.msra.mxu0 0
        %801 = vmatprep.subr.bf16.mxu0 0
        %802 = vmatpush1.bf16.xpose.msra.mxu0 0
        %803 = vmatprep.subr.bf16.mxu0 0
        %804 = vmatpush1.bf16.xpose.msra.mxu0 0
        %805 = vmatprep.subr.bf16.mxu0 0
        %806 = vmatpush1.bf16.xpose.msra.mxu0 0
        %807 = vmatprep.subr.bf16.mxu0 0
        %808 = vmatpush1.bf16.xpose.msra.mxu0 0
        %809 = vmatprep.subr.bf16.mxu0 0
        %810 = vmatpush1.bf16.xpose.msra.mxu0 0
        %811 = vmatprep.subr.bf16.mxu0 0
        %812 = vmatpush1.bf16.xpose.msra.mxu0 0
        %813 = vmatprep.subr.bf16.mxu0 0
        %814 = vmatpush1.bf16.xpose.msra.mxu0 0
        %815 = vmatprep.subr.bf16.mxu0 0
        %816 = vmatpush1.bf16.xpose.msra.mxu0 0
        %817 = vmatprep.subr.bf16.mxu0 0
        %818 = vmatpush1.bf16.xpose.msra.mxu0 0
        %819 = vmatprep.subr.bf16.mxu0 0
        %820 = vmatpush1.bf16.xpose.msra.mxu0 0
        %821 = vmatprep.subr.bf16.mxu0 0
        %822 = vmatpush1.bf16.xpose.msra.mxu0 0
        %823 = vmatprep.subr.bf16.mxu0 0
        %824 = vmatpush1.bf16.xpose.msra.mxu0 0
        %825 = vmatprep.mubr.bf16.mxu0 0
        %826 = vmatmul.mubr.bf16.gmra.mrb[0].mxu0 %v788
        %v827 = vpop.f32.mrb[0].mxu0
        %v828 = vadd.f32 0.0, %v827
        %v829 = vpop.f32.mrb[0].mxu0
        %v830 = vpop.f32.mrb[0].mxu0
        %v831 = vpop.f32.mrb[0].mxu0
        %832 = vdwg.mxu0
        %834 = vrot.lane.b32.xlu0 %v776, 96
        %v835 = vpop.permute.xlu0 %834
        %v837 = vsel %vm786, %v768, 0
        %v840 = vsel %vm786, %v835, 0
        %842 = vmatprep.subr.bf16.mxu0 0
        %843 = vmatpush1.bf16.xpose.msra.mxu0 %v840
        %844 = vmatprep.subr.bf16.mxu0 0
        %845 = vmatpush1.bf16.xpose.msra.mxu0 0
        %846 = vmatprep.subr.bf16.mxu0 0
        %847 = vmatpush1.bf16.xpose.msra.mxu0 0
        %848 = vmatprep.subr.bf16.mxu0 0
        %849 = vmatpush1.bf16.xpose.msra.mxu0 0
        %850 = vmatprep.subr.bf16.mxu0 0
        %851 = vmatpush1.bf16.xpose.msra.mxu0 0
        %852 = vmatprep.subr.bf16.mxu0 0
        %853 = vmatpush1.bf16.xpose.msra.mxu0 0
        %854 = vmatprep.subr.bf16.mxu0 0
        %855 = vmatpush1.bf16.xpose.msra.mxu0 0
        %856 = vmatprep.subr.bf16.mxu0 0
        %857 = vmatpush1.bf16.xpose.msra.mxu0 0
        %858 = vmatprep.subr.bf16.mxu0 0
        %859 = vmatpush1.bf16.xpose.msra.mxu0 0
        %860 = vmatprep.subr.bf16.mxu0 0
        %861 = vmatpush1.bf16.xpose.msra.mxu0 0
        %862 = vmatprep.subr.bf16.mxu0 0
        %863 = vmatpush1.bf16.xpose.msra.mxu0 0
        %864 = vmatprep.subr.bf16.mxu0 0
        %865 = vmatpush1.bf16.xpose.msra.mxu0 0
        %866 = vmatprep.subr.bf16.mxu0 0
        %867 = vmatpush1.bf16.xpose.msra.mxu0 0
        %868 = vmatprep.subr.bf16.mxu0 0
        %869 = vmatpush1.bf16.xpose.msra.mxu0 0
        %870 = vmatprep.subr.bf16.mxu0 0
        %871 = vmatpush1.bf16.xpose.msra.mxu0 0
        %872 = vmatprep.subr.bf16.mxu0 0
        %873 = vmatpush1.bf16.xpose.msra.mxu0 0
        %874 = vmatprep.mubr.bf16.mxu0 0
        %875 = vmatmul.mubr.bf16.gmra.mrb[0].mxu0 %v837
        %v876 = vpop.f32.mrb[0].mxu0
        %v877 = vadd.f32 0.0, %v876
        %v878 = vpop.f32.mrb[0].mxu0
        %v879 = vpop.f32.mrb[0].mxu0
        %v880 = vpop.f32.mrb[0].mxu0
        %881 = vdwg.mxu0
        %883 = vrot.lane.b32.xlu0 %v777, 96
        %v884 = vpop.permute.xlu0 %883
        %v886 = vsel %vm786, %v769, 0
        %v889 = vsel %vm786, %v884, 0
        %891 = vmatprep.subr.bf16.mxu0 0
        %892 = vmatpush1.bf16.xpose.msra.mxu0 %v889
        %893 = vmatprep.subr.bf16.mxu0 0
        %894 = vmatpush1.bf16.xpose.msra.mxu0 0
        %895 = vmatprep.subr.bf16.mxu0 0
        %896 = vmatpush1.bf16.xpose.msra.mxu0 0
        %897 = vmatprep.subr.bf16.mxu0 0
        %898 = vmatpush1.bf16.xpose.msra.mxu0 0
        %899 = vmatprep.subr.bf16.mxu0 0
        %900 = vmatpush1.bf16.xpose.msra.mxu0 0
        %901 = vmatprep.subr.bf16.mxu0 0
        %902 = vmatpush1.bf16.xpose.msra.mxu0 0
        %903 = vmatprep.subr.bf16.mxu0 0
        %904 = vmatpush1.bf16.xpose.msra.mxu0 0
        %905 = vmatprep.subr.bf16.mxu0 0
        %906 = vmatpush1.bf16.xpose.msra.mxu0 0
        %907 = vmatprep.subr.bf16.mxu0 0
        %908 = vmatpush1.bf16.xpose.msra.mxu0 0
        %909 = vmatprep.subr.bf16.mxu0 0
        %910 = vmatpush1.bf16.xpose.msra.mxu0 0
        %911 = vmatprep.subr.bf16.mxu0 0
        %912 = vmatpush1.bf16.xpose.msra.mxu0 0
        %913 = vmatprep.subr.bf16.mxu0 0
        %914 = vmatpush1.bf16.xpose.msra.mxu0 0
        %915 = vmatprep.subr.bf16.mxu0 0
        %916 = vmatpush1.bf16.xpose.msra.mxu0 0
        %917 = vmatprep.subr.bf16.mxu0 0
        %918 = vmatpush1.bf16.xpose.msra.mxu0 0
        %919 = vmatprep.subr.bf16.mxu0 0
        %920 = vmatpush1.bf16.xpose.msra.mxu0 0
        %921 = vmatprep.subr.bf16.mxu0 0
        %922 = vmatpush1.bf16.xpose.msra.mxu0 0
        %923 = vmatprep.mubr.bf16.mxu0 0
        %924 = vmatmul.mubr.bf16.gmra.mrb[0].mxu0 %v886
        %v925 = vpop.f32.mrb[0].mxu0
        %v926 = vadd.f32 0.0, %v925
        %v927 = vpop.f32.mrb[0].mxu0
        %v928 = vpop.f32.mrb[0].mxu0
        %v929 = vpop.f32.mrb[0].mxu0
        %930 = vdwg.mxu0
        %932 = vrot.lane.b32.xlu0 %v778, 96
        %v933 = vpop.permute.xlu0 %932
        %v935 = vsel %vm786, %v770, 0
        %v938 = vsel %vm786, %v933, 0
        %940 = vmatprep.subr.bf16.mxu0 0
        %941 = vmatpush1.bf16.xpose.msra.mxu0 %v938
        %942 = vmatprep.subr.bf16.mxu0 0
        %943 = vmatpush1.bf16.xpose.msra.mxu0 0
        %944 = vmatprep.subr.bf16.mxu0 0
        %945 = vmatpush1.bf16.xpose.msra.mxu0 0
        %946 = vmatprep.subr.bf16.mxu0 0
        %947 = vmatpush1.bf16.xpose.msra.mxu0 0
        %948 = vmatprep.subr.bf16.mxu0 0
        %949 = vmatpush1.bf16.xpose.msra.mxu0 0
        %950 = vmatprep.subr.bf16.mxu0 0
        %951 = vmatpush1.bf16.xpose.msra.mxu0 0
        %952 = vmatprep.subr.bf16.mxu0 0
        %953 = vmatpush1.bf16.xpose.msra.mxu0 0
        %954 = vmatprep.subr.bf16.mxu0 0
        %955 = vmatpush1.bf16.xpose.msra.mxu0 0
        %956 = vmatprep.subr.bf16.mxu0 0
        %957 = vmatpush1.bf16.xpose.msra.mxu0 0
        %958 = vmatprep.subr.bf16.mxu0 0
        %959 = vmatpush1.bf16.xpose.msra.mxu0 0
        %960 = vmatprep.subr.bf16.mxu0 0
        %961 = vmatpush1.bf16.xpose.msra.mxu0 0
        %962 = vmatprep.subr.bf16.mxu0 0
        %963 = vmatpush1.bf16.xpose.msra.mxu0 0
        %964 = vmatprep.subr.bf16.mxu0 0
        %965 = vmatpush1.bf16.xpose.msra.mxu0 0
        %966 = vmatprep.subr.bf16.mxu0 0
        %967 = vmatpush1.bf16.xpose.msra.mxu0 0
        %968 = vmatprep.subr.bf16.mxu0 0
        %969 = vmatpush1.bf16.xpose.msra.mxu0 0
        %970 = vmatprep.subr.bf16.mxu0 0
        %971 = vmatpush1.bf16.xpose.msra.mxu0 0
        %972 = vmatprep.mubr.bf16.mxu0 0
        %973 = vmatmul.mubr.bf16.gmra.mrb[0].mxu0 %v935
        %v974 = vpop.f32.mrb[0].mxu0
        %v975 = vadd.f32 0.0, %v974
        %v976 = vpop.f32.mrb[0].mxu0
        %v977 = vpop.f32.mrb[0].mxu0
        %v978 = vpop.f32.mrb[0].mxu0
        %979 = vdwg.mxu0
        %981 = vrot.lane.b32.xlu0 %v779, 96
        %v982 = vpop.permute.xlu0 %981
        %v984 = vsel %vm786, %v771, 0
        %v987 = vsel %vm786, %v982, 0
        %989 = vmatprep.subr.bf16.mxu0 0
        %990 = vmatpush1.bf16.xpose.msra.mxu0 %v987
        %991 = vmatprep.subr.bf16.mxu0 0
        %992 = vmatpush1.bf16.xpose.msra.mxu0 0
        %993 = vmatprep.subr.bf16.mxu0 0
        %994 = vmatpush1.bf16.xpose.msra.mxu0 0
        %995 = vmatprep.subr.bf16.mxu0 0
        %996 = vmatpush1.bf16.xpose.msra.mxu0 0
        %997 = vmatprep.subr.bf16.mxu0 0
        %998 = vmatpush1.bf16.xpose.msra.mxu0 0
        %999 = vmatprep.subr.bf16.mxu0 0
        %1000 = vmatpush1.bf16.xpose.msra.mxu0 0
        %1001 = vmatprep.subr.bf16.mxu0 0
        %1002 = vmatpush1.bf16.xpose.msra.mxu0 0
        %1003 = vmatprep.subr.bf16.mxu0 0
        %1004 = vmatpush1.bf16.xpose.msra.mxu0 0
        %1005 = vmatprep.subr.bf16.mxu0 0
        %1006 = vmatpush1.bf16.xpose.msra.mxu0 0
        %1007 = vmatprep.subr.bf16.mxu0 0
        %1008 = vmatpush1.bf16.xpose.msra.mxu0 0
        %1009 = vmatprep.subr.bf16.mxu0 0
        %1010 = vmatpush1.bf16.xpose.msra.mxu0 0
        %1011 = vmatprep.subr.bf16.mxu0 0
        %1012 = vmatpush1.bf16.xpose.msra.mxu0 0
        %1013 = vmatprep.subr.bf16.mxu0 0
        %1014 = vmatpush1.bf16.xpose.msra.mxu0 0
        %1015 = vmatprep.subr.bf16.mxu0 0
        %1016 = vmatpush1.bf16.xpose.msra.mxu0 0
        %1017 = vmatprep.subr.bf16.mxu0 0
        %1018 = vmatpush1.bf16.xpose.msra.mxu0 0
        %1019 = vmatprep.subr.bf16.mxu0 0
        %1020 = vmatpush1.bf16.xpose.msra.mxu0 0
        %1021 = vmatprep.mubr.bf16.mxu0 0
        %1022 = vmatmul.mubr.bf16.gmra.mrb[0].mxu0 %v984
        %v1023 = vpop.f32.mrb[0].mxu0
        %v1024 = vadd.f32 0.0, %v1023
        %v1025 = vpop.f32.mrb[0].mxu0
        %v1026 = vpop.f32.mrb[0].mxu0
        %v1027 = vpop.f32.mrb[0].mxu0
        %1028 = vdwg.mxu0
        %1030 = vrot.lane.b32.xlu0 %v780, 96
        %v1031 = vpop.permute.xlu0 %1030
        %v1033 = vsel %vm786, %v772, 0
        %v1036 = vsel %vm786, %v1031, 0
        %1038 = vmatprep.subr.bf16.mxu0 0
        %1039 = vmatpush1.bf16.xpose.msra.mxu0 %v1036
        %1040 = vmatprep.subr.bf16.mxu0 0
        %1041 = vmatpush1.bf16.xpose.msra.mxu0 0
        %1042 = vmatprep.subr.bf16.mxu0 0
        %1043 = vmatpush1.bf16.xpose.msra.mxu0 0
        %1044 = vmatprep.subr.bf16.mxu0 0
        %1045 = vmatpush1.bf16.xpose.msra.mxu0 0
        %1046 = vmatprep.subr.bf16.mxu0 0
        %1047 = vmatpush1.bf16.xpose.msra.mxu0 0
        %1048 = vmatprep.subr.bf16.mxu0 0
        %1049 = vmatpush1.bf16.xpose.msra.mxu0 0
        %1050 = vmatprep.subr.bf16.mxu0 0
        %1051 = vmatpush1.bf16.xpose.msra.mxu0 0
        %1052 = vmatprep.subr.bf16.mxu0 0
        %1053 = vmatpush1.bf16.xpose.msra.mxu0 0
        %1054 = vmatprep.subr.bf16.mxu0 0
        %1055 = vmatpush1.bf16.xpose.msra.mxu0 0
        %1056 = vmatprep.subr.bf16.mxu0 0
        %1057 = vmatpush1.bf16.xpose.msra.mxu0 0
        %1058 = vmatprep.subr.bf16.mxu0 0
        %1059 = vmatpush1.bf16.xpose.msra.mxu0 0
        %1060 = vmatprep.subr.bf16.mxu0 0
        %1061 = vmatpush1.bf16.xpose.msra.mxu0 0
        %1062 = vmatprep.subr.bf16.mxu0 0
        %1063 = vmatpush1.bf16.xpose.msra.mxu0 0
        %1064 = vmatprep.subr.bf16.mxu0 0
        %1065 = vmatpush1.bf16.xpose.msra.mxu0 0
        %1066 = vmatprep.subr.bf16.mxu0 0
        %1067 = vmatpush1.bf16.xpose.msra.mxu0 0
        %1068 = vmatprep.subr.bf16.mxu0 0
        %1069 = vmatpush1.bf16.xpose.msra.mxu0 0
        %1070 = vmatprep.mubr.bf16.mxu0 0
        %1071 = vmatmul.mubr.bf16.gmra.mrb[0].mxu0 %v1033
        %v1072 = vpop.f32.mrb[0].mxu0
        %v1073 = vadd.f32 0.0, %v1072
        %v1074 = vpop.f32.mrb[0].mxu0
        %v1075 = vpop.f32.mrb[0].mxu0
        %v1076 = vpop.f32.mrb[0].mxu0
        %1077 = vdwg.mxu0
        %1079 = vrot.lane.b32.xlu0 %v781, 96
        %v1080 = vpop.permute.xlu0 %1079
        %v1082 = vsel %vm786, %v773, 0
        %v1085 = vsel %vm786, %v1080, 0
        %1087 = vmatprep.subr.bf16.mxu0 0
        %1088 = vmatpush1.bf16.xpose.msra.mxu0 %v1085
        %1089 = vmatprep.subr.bf16.mxu0 0
        %1090 = vmatpush1.bf16.xpose.msra.mxu0 0
        %1091 = vmatprep.subr.bf16.mxu0 0
        %1092 = vmatpush1.bf16.xpose.msra.mxu0 0
        %1093 = vmatprep.subr.bf16.mxu0 0
        %1094 = vmatpush1.bf16.xpose.msra.mxu0 0
        %1095 = vmatprep.subr.bf16.mxu0 0
        %1096 = vmatpush1.bf16.xpose.msra.mxu0 0
        %1097 = vmatprep.subr.bf16.mxu0 0
        %1098 = vmatpush1.bf16.xpose.msra.mxu0 0
        %1099 = vmatprep.subr.bf16.mxu0 0
        %1100 = vmatpush1.bf16.xpose.msra.mxu0 0
        %1101 = vmatprep.subr.bf16.mxu0 0
        %1102 = vmatpush1.bf16.xpose.msra.mxu0 0
        %1103 = vmatprep.subr.bf16.mxu0 0
        %1104 = vmatpush1.bf16.xpose.msra.mxu0 0
        %1105 = vmatprep.subr.bf16.mxu0 0
        %1106 = vmatpush1.bf16.xpose.msra.mxu0 0
        %1107 = vmatprep.subr.bf16.mxu0 0
        %1108 = vmatpush1.bf16.xpose.msra.mxu0 0
        %1109 = vmatprep.subr.bf16.mxu0 0
        %1110 = vmatpush1.bf16.xpose.msra.mxu0 0
        %1111 = vmatprep.subr.bf16.mxu0 0
        %1112 = vmatpush1.bf16.xpose.msra.mxu0 0
        %1113 = vmatprep.subr.bf16.mxu0 0
        %1114 = vmatpush1.bf16.xpose.msra.mxu0 0
        %1115 = vmatprep.subr.bf16.mxu0 0
        %1116 = vmatpush1.bf16.xpose.msra.mxu0 0
        %1117 = vmatprep.subr.bf16.mxu0 0
        %1118 = vmatpush1.bf16.xpose.msra.mxu0 0
        %1119 = vmatprep.mubr.bf16.mxu0 0
        %1120 = vmatmul.mubr.bf16.gmra.mrb[0].mxu0 %v1082
        %v1121 = vpop.f32.mrb[0].mxu0
        %v1122 = vadd.f32 0.0, %v1121
        %v1123 = vpop.f32.mrb[0].mxu0
        %v1124 = vpop.f32.mrb[0].mxu0
        %v1125 = vpop.f32.mrb[0].mxu0
        %1126 = vdwg.mxu0
        %1128 = vrot.lane.b32.xlu0 %v782, 96
        %v1129 = vpop.permute.xlu0 %1128
        %v1131 = vsel %vm786, %v774, 0
        %v1134 = vsel %vm786, %v1129, 0
        %1136 = vmatprep.subr.bf16.mxu0 0
        %1137 = vmatpush1.bf16.xpose.msra.mxu0 %v1134
        %1138 = vmatprep.subr.bf16.mxu0 0
        %1139 = vmatpush1.bf16.xpose.msra.mxu0 0
        %1140 = vmatprep.subr.bf16.mxu0 0
        %1141 = vmatpush1.bf16.xpose.msra.mxu0 0
        %1142 = vmatprep.subr.bf16.mxu0 0
        %1143 = vmatpush1.bf16.xpose.msra.mxu0 0
        %1144 = vmatprep.subr.bf16.mxu0 0
        %1145 = vmatpush1.bf16.xpose.msra.mxu0 0
        %1146 = vmatprep.subr.bf16.mxu0 0
        %1147 = vmatpush1.bf16.xpose.msra.mxu0 0
        %1148 = vmatprep.subr.bf16.mxu0 0
        %1149 = vmatpush1.bf16.xpose.msra.mxu0 0
        %1150 = vmatprep.subr.bf16.mxu0 0
        %1151 = vmatpush1.bf16.xpose.msra.mxu0 0
        %1152 = vmatprep.subr.bf16.mxu0 0
        %1153 = vmatpush1.bf16.xpose.msra.mxu0 0
        %1154 = vmatprep.subr.bf16.mxu0 0
        %1155 = vmatpush1.bf16.xpose.msra.mxu0 0
        %1156 = vmatprep.subr.bf16.mxu0 0
        %1157 = vmatpush1.bf16.xpose.msra.mxu0 0
        %1158 = vmatprep.subr.bf16.mxu0 0
        %1159 = vmatpush1.bf16.xpose.msra.mxu0 0
        %1160 = vmatprep.subr.bf16.mxu0 0
        %1161 = vmatpush1.bf16.xpose.msra.mxu0 0
        %1162 = vmatprep.subr.bf16.mxu0 0
        %1163 = vmatpush1.bf16.xpose.msra.mxu0 0
        %1164 = vmatprep.subr.bf16.mxu0 0
        %1165 = vmatpush1.bf16.xpose.msra.mxu0 0
        %1166 = vmatprep.subr.bf16.mxu0 0
        %1167 = vmatpush1.bf16.xpose.msra.mxu0 0
        %1168 = vmatprep.mubr.bf16.mxu0 0
        %1169 = vmatmul.mubr.bf16.gmra.mrb[0].mxu0 %v1131
        %v1170 = vpop.f32.mrb[0].mxu0
        %v1171 = vadd.f32 0.0, %v1170
        %v1172 = vpop.f32.mrb[0].mxu0
        %v1173 = vpop.f32.mrb[0].mxu0
        %v1174 = vpop.f32.mrb[0].mxu0
        %1175 = vdwg.mxu0
        %v1176 = vlaneseq
        %v1177 = vshrl.u32 %v1176, 7
        %v1178 = vlaneseq
        %v1179 = vand.u32 %v1178, 127
        %vm1180 = vcmp.gt.s32.totalorder %v1179, %v1177
        %v1181 = vsel %vm1180, -1e+09, %v828
        %v1182 = vsel %vm1180, -1e+09, %v877
        %v1183 = vsel %vm1180, -1e+09, %v926
        %v1184 = vsel %vm1180, -1e+09, %v975
        %v1185 = vsel %vm1180, -1e+09, %v1024
        %v1186 = vsel %vm1180, -1e+09, %v1073
        %v1187 = vsel %vm1180, -1e+09, %v1122
        %v1188 = vsel %vm1180, -1e+09, %v1171
        %v1189 = vsel %vm786, %v1181, -inf
        %1190 = vmax.xlane.f32.xlu0 %v1189
        %v1191 = vpop.xlane.xlu0 %1190
        %v1192 = vsel %vm786, %v1182, -inf
        %1193 = vmax.xlane.f32.xlu0 %v1192
        %v1194 = vpop.xlane.xlu0 %1193
        %v1195 = vsel %vm786, %v1183, -inf
        %1196 = vmax.xlane.f32.xlu0 %v1195
        %v1197 = vpop.xlane.xlu0 %1196
        %v1198 = vsel %vm786, %v1184, -inf
        %1199 = vmax.xlane.f32.xlu0 %v1198
        %v1200 = vpop.xlane.xlu0 %1199
        %v1201 = vsel %vm786, %v1185, -inf
        %1202 = vmax.xlane.f32.xlu0 %v1201
        %v1203 = vpop.xlane.xlu0 %1202
        %v1204 = vsel %vm786, %v1186, -inf
        %1205 = vmax.xlane.f32.xlu0 %v1204
        %v1206 = vpop.xlane.xlu0 %1205
        %v1207 = vsel %vm786, %v1187, -inf
        %1208 = vmax.xlane.f32.xlu0 %v1207
        %v1209 = vpop.xlane.xlu0 %1208
        %v1210 = vsel %vm786, %v1188, -inf
        %1211 = vmax.xlane.f32.xlu0 %v1210
        %v1212 = vpop.xlane.xlu0 %1211
        %v1213 = vsub.f32 %v1181, %v1191
        %v1214 = vsub.f32 %v1182, %v1194
        %v1215 = vsub.f32 %v1183, %v1197
        %v1216 = vsub.f32 %v1184, %v1200
        %v1217 = vsub.f32 %v1185, %v1203
        %v1218 = vsub.f32 %v1186, %v1206
        %v1219 = vsub.f32 %v1187, %v1209
        %v1220 = vsub.f32 %v1188, %v1212
        %v1221 = vmul.f32 %v1213, 1.442695
        %v1222 = vpow.pop %v1221
        %v1223 = vmul.f32 %v1214, 1.442695
        %v1224 = vpow.pop %v1223
        %v1225 = vmul.f32 %v1215, 1.442695
        %v1226 = vpow.pop %v1225
        %v1227 = vmul.f32 %v1216, 1.442695
        %v1228 = vpow.pop %v1227
        %v1229 = vmul.f32 %v1217, 1.442695
        %v1230 = vpow.pop %v1229
        %v1231 = vmul.f32 %v1218, 1.442695
        %v1232 = vpow.pop %v1231
        %v1233 = vmul.f32 %v1219, 1.442695
        %v1234 = vpow.pop %v1233
        %v1235 = vmul.f32 %v1220, 1.442695
        %v1236 = vpow.pop %v1235
        %v1237 = vsel %vm786, %v1222, 0.0
        %1238 = vadd.xlane.f32.xlu0 %v1237
        %v1239 = vpop.xlane.xlu0 %1238
        %v1240 = vsel %vm786, %v1224, 0.0
        %1241 = vadd.xlane.f32.xlu0 %v1240
        %v1242 = vpop.xlane.xlu0 %1241
        %v1243 = vsel %vm786, %v1226, 0.0
        %1244 = vadd.xlane.f32.xlu0 %v1243
        %v1245 = vpop.xlane.xlu0 %1244
        %v1246 = vsel %vm786, %v1228, 0.0
        %1247 = vadd.xlane.f32.xlu0 %v1246
        %v1248 = vpop.xlane.xlu0 %1247
        %v1249 = vsel %vm786, %v1230, 0.0
        %1250 = vadd.xlane.f32.xlu0 %v1249
        %v1251 = vpop.xlane.xlu0 %1250
        %v1252 = vsel %vm786, %v1232, 0.0
        %1253 = vadd.xlane.f32.xlu0 %v1252
        %v1254 = vpop.xlane.xlu0 %1253
        %v1255 = vsel %vm786, %v1234, 0.0
        %1256 = vadd.xlane.f32.xlu0 %v1255
        %v1257 = vpop.xlane.xlu0 %1256
        %v1258 = vsel %vm786, %v1236, 0.0
        %1259 = vadd.xlane.f32.xlu0 %v1258
        %v1260 = vpop.xlane.xlu0 %1259
        %v1261 = vrcp.pop %v1239
        %v1262 = vrcp.pop %v1242
        %v1263 = vrcp.pop %v1245
        %v1264 = vrcp.pop %v1248
        %v1265 = vrcp.pop %v1251
        %v1266 = vrcp.pop %v1254
        %v1267 = vrcp.pop %v1257
        %v1268 = vrcp.pop %v1260
        %v1269 = vmul.f32 %v1222, %v1261
        %v1270 = vmul.f32 %v1224, %v1262
        %v1271 = vmul.f32 %v1226, %v1263
        %v1272 = vmul.f32 %v1228, %v1264
        %v1273 = vmul.f32 %v1230, %v1265
        %v1274 = vmul.f32 %v1232, %v1266
        %v1275 = vmul.f32 %v1234, %v1267
        %v1276 = vmul.f32 %v1236, %v1268
        %v1277 = vpack.c.bf16 %v1269, %v1269
        %v1278 = vpack.c.bf16 %v1270, %v1270
        %v1279 = vpack.c.bf16 %v1271, %v1271
        %v1280 = vpack.c.bf16 %v1272, %v1272
        %v1281 = vpack.c.bf16 %v1273, %v1273
        %v1282 = vpack.c.bf16 %v1274, %v1274
        %v1283 = vpack.c.bf16 %v1275, %v1275
        %v1284 = vpack.c.bf16 %v1276, %v1276
        %1285 = vrot.lane.b32.xlu0 %v775, 64
        %v1286 = vpop.permute.xlu0 %1285
        %v1288 = vsel %vm786, %v1277, 0
        %vm1290 = vcmask 1043456
        %v1292 = vsel %vm1290, %v1286, 0
        %1294 = vmatprep.subr.bf16.mxu0 0
        %1295 = vmatpush1.bf16.msra.mxu0 %v1292
        %1296 = vmatprep.subr.bf16.mxu0 0
        %1297 = vmatpush1.bf16.msra.mxu0 0
        %1298 = vmatprep.subr.bf16.mxu0 0
        %1299 = vmatpush1.bf16.msra.mxu0 0
        %1300 = vmatprep.subr.bf16.mxu0 0
        %1301 = vmatpush1.bf16.msra.mxu0 0
        %1302 = vmatprep.subr.bf16.mxu0 0
        %1303 = vmatpush1.bf16.msra.mxu0 0
        %1304 = vmatprep.subr.bf16.mxu0 0
        %1305 = vmatpush1.bf16.msra.mxu0 0
        %1306 = vmatprep.subr.bf16.mxu0 0
        %1307 = vmatpush1.bf16.msra.mxu0 0
        %1308 = vmatprep.subr.bf16.mxu0 0
        %1309 = vmatpush1.bf16.msra.mxu0 0
        %1310 = vmatprep.subr.bf16.mxu0 0
        %1311 = vmatpush1.bf16.msra.mxu0 0
        %1312 = vmatprep.subr.bf16.mxu0 0
        %1313 = vmatpush1.bf16.msra.mxu0 0
        %1314 = vmatprep.subr.bf16.mxu0 0
        %1315 = vmatpush1.bf16.msra.mxu0 0
        %1316 = vmatprep.subr.bf16.mxu0 0
        %1317 = vmatpush1.bf16.msra.mxu0 0
        %1318 = vmatprep.subr.bf16.mxu0 0
        %1319 = vmatpush1.bf16.msra.mxu0 0
        %1320 = vmatprep.subr.bf16.mxu0 0
        %1321 = vmatpush1.bf16.msra.mxu0 0
        %1322 = vmatprep.subr.bf16.mxu0 0
        %1323 = vmatpush1.bf16.msra.mxu0 0
        %1324 = vmatprep.subr.bf16.mxu0 0
        %1325 = vmatpush1.bf16.msra.mxu0 0
        %1326 = vmatprep.mubr.bf16.mxu0 0
        %1327 = vmatmul.mubr.bf16.gmra.mrb[0].mxu0 %v1288
        %v1328 = vpop.f32.mrb[0].mxu0
        %v1329 = vadd.f32 0.0, %v1328
        %v1330 = vpop.f32.mrb[0].mxu0
        %v1331 = vpop.f32.mrb[0].mxu0
        %v1332 = vpop.f32.mrb[0].mxu0
        %1333 = vdwg.mxu0
        %1334 = vrot.lane.b32.xlu0 %v776, 64
        %v1335 = vpop.permute.xlu0 %1334
        %v1337 = vsel %vm786, %v1278, 0
        %v1340 = vsel %vm1290, %v1335, 0
        %1342 = vmatprep.subr.bf16.mxu0 0
        %1343 = vmatpush1.bf16.msra.mxu0 %v1340
        %1344 = vmatprep.subr.bf16.mxu0 0
        %1345 = vmatpush1.bf16.msra.mxu0 0
        %1346 = vmatprep.subr.bf16.mxu0 0
        %1347 = vmatpush1.bf16.msra.mxu0 0
        %1348 = vmatprep.subr.bf16.mxu0 0
        %1349 = vmatpush1.bf16.msra.mxu0 0
        %1350 = vmatprep.subr.bf16.mxu0 0
        %1351 = vmatpush1.bf16.msra.mxu0 0
        %1352 = vmatprep.subr.bf16.mxu0 0
        %1353 = vmatpush1.bf16.msra.mxu0 0
        %1354 = vmatprep.subr.bf16.mxu0 0
        %1355 = vmatpush1.bf16.msra.mxu0 0
        %1356 = vmatprep.subr.bf16.mxu0 0
        %1357 = vmatpush1.bf16.msra.mxu0 0
        %1358 = vmatprep.subr.bf16.mxu0 0
        %1359 = vmatpush1.bf16.msra.mxu0 0
        %1360 = vmatprep.subr.bf16.mxu0 0
        %1361 = vmatpush1.bf16.msra.mxu0 0
        %1362 = vmatprep.subr.bf16.mxu0 0
        %1363 = vmatpush1.bf16.msra.mxu0 0
        %1364 = vmatprep.subr.bf16.mxu0 0
        %1365 = vmatpush1.bf16.msra.mxu0 0
        %1366 = vmatprep.subr.bf16.mxu0 0
        %1367 = vmatpush1.bf16.msra.mxu0 0
        %1368 = vmatprep.subr.bf16.mxu0 0
        %1369 = vmatpush1.bf16.msra.mxu0 0
        %1370 = vmatprep.subr.bf16.mxu0 0
        %1371 = vmatpush1.bf16.msra.mxu0 0
        %1372 = vmatprep.subr.bf16.mxu0 0
        %1373 = vmatpush1.bf16.msra.mxu0 0
        %1374 = vmatprep.mubr.bf16.mxu0 0
        %1375 = vmatmul.mubr.bf16.gmra.mrb[0].mxu0 %v1337
        %v1376 = vpop.f32.mrb[0].mxu0
        %v1377 = vadd.f32 0.0, %v1376
        %v1378 = vpop.f32.mrb[0].mxu0
        %v1379 = vpop.f32.mrb[0].mxu0
        %v1380 = vpop.f32.mrb[0].mxu0
        %1381 = vdwg.mxu0
        %1382 = vrot.lane.b32.xlu0 %v777, 64
        %v1383 = vpop.permute.xlu0 %1382
        %v1385 = vsel %vm786, %v1279, 0
        %v1388 = vsel %vm1290, %v1383, 0
        %1390 = vmatprep.subr.bf16.mxu0 0
        %1391 = vmatpush1.bf16.msra.mxu0 %v1388
        %1392 = vmatprep.subr.bf16.mxu0 0
        %1393 = vmatpush1.bf16.msra.mxu0 0
        %1394 = vmatprep.subr.bf16.mxu0 0
        %1395 = vmatpush1.bf16.msra.mxu0 0
        %1396 = vmatprep.subr.bf16.mxu0 0
        %1397 = vmatpush1.bf16.msra.mxu0 0
        %1398 = vmatprep.subr.bf16.mxu0 0
        %1399 = vmatpush1.bf16.msra.mxu0 0
        %1400 = vmatprep.subr.bf16.mxu0 0
        %1401 = vmatpush1.bf16.msra.mxu0 0
        %1402 = vmatprep.subr.bf16.mxu0 0
        %1403 = vmatpush1.bf16.msra.mxu0 0
        %1404 = vmatprep.subr.bf16.mxu0 0
        %1405 = vmatpush1.bf16.msra.mxu0 0
        %1406 = vmatprep.subr.bf16.mxu0 0
        %1407 = vmatpush1.bf16.msra.mxu0 0
        %1408 = vmatprep.subr.bf16.mxu0 0
        %1409 = vmatpush1.bf16.msra.mxu0 0
        %1410 = vmatprep.subr.bf16.mxu0 0
        %1411 = vmatpush1.bf16.msra.mxu0 0
        %1412 = vmatprep.subr.bf16.mxu0 0
        %1413 = vmatpush1.bf16.msra.mxu0 0
        %1414 = vmatprep.subr.bf16.mxu0 0
        %1415 = vmatpush1.bf16.msra.mxu0 0
        %1416 = vmatprep.subr.bf16.mxu0 0
        %1417 = vmatpush1.bf16.msra.mxu0 0
        %1418 = vmatprep.subr.bf16.mxu0 0
        %1419 = vmatpush1.bf16.msra.mxu0 0
        %1420 = vmatprep.subr.bf16.mxu0 0
        %1421 = vmatpush1.bf16.msra.mxu0 0
        %1422 = vmatprep.mubr.bf16.mxu0 0
        %1423 = vmatmul.mubr.bf16.gmra.mrb[0].mxu0 %v1385
        %v1424 = vpop.f32.mrb[0].mxu0
        %v1425 = vadd.f32 0.0, %v1424
        %v1426 = vpop.f32.mrb[0].mxu0
        %v1427 = vpop.f32.mrb[0].mxu0
        %v1428 = vpop.f32.mrb[0].mxu0
        %1429 = vdwg.mxu0
        %1430 = vrot.lane.b32.xlu0 %v778, 64
        %v1431 = vpop.permute.xlu0 %1430
        %v1433 = vsel %vm786, %v1280, 0
        %v1436 = vsel %vm1290, %v1431, 0
        %1438 = vmatprep.subr.bf16.mxu0 0
        %1439 = vmatpush1.bf16.msra.mxu0 %v1436
        %1440 = vmatprep.subr.bf16.mxu0 0
        %1441 = vmatpush1.bf16.msra.mxu0 0
        %1442 = vmatprep.subr.bf16.mxu0 0
        %1443 = vmatpush1.bf16.msra.mxu0 0
        %1444 = vmatprep.subr.bf16.mxu0 0
        %1445 = vmatpush1.bf16.msra.mxu0 0
        %1446 = vmatprep.subr.bf16.mxu0 0
        %1447 = vmatpush1.bf16.msra.mxu0 0
        %1448 = vmatprep.subr.bf16.mxu0 0
        %1449 = vmatpush1.bf16.msra.mxu0 0
        %1450 = vmatprep.subr.bf16.mxu0 0
        %1451 = vmatpush1.bf16.msra.mxu0 0
        %1452 = vmatprep.subr.bf16.mxu0 0
        %1453 = vmatpush1.bf16.msra.mxu0 0
        %1454 = vmatprep.subr.bf16.mxu0 0
        %1455 = vmatpush1.bf16.msra.mxu0 0
        %1456 = vmatprep.subr.bf16.mxu0 0
        %1457 = vmatpush1.bf16.msra.mxu0 0
        %1458 = vmatprep.subr.bf16.mxu0 0
        %1459 = vmatpush1.bf16.msra.mxu0 0
        %1460 = vmatprep.subr.bf16.mxu0 0
        %1461 = vmatpush1.bf16.msra.mxu0 0
        %1462 = vmatprep.subr.bf16.mxu0 0
        %1463 = vmatpush1.bf16.msra.mxu0 0
        %1464 = vmatprep.subr.bf16.mxu0 0
        %1465 = vmatpush1.bf16.msra.mxu0 0
        %1466 = vmatprep.subr.bf16.mxu0 0
        %1467 = vmatpush1.bf16.msra.mxu0 0
        %1468 = vmatprep.subr.bf16.mxu0 0
        %1469 = vmatpush1.bf16.msra.mxu0 0
        %1470 = vmatprep.mubr.bf16.mxu0 0
        %1471 = vmatmul.mubr.bf16.gmra.mrb[0].mxu0 %v1433
        %v1472 = vpop.f32.mrb[0].mxu0
        %v1473 = vadd.f32 0.0, %v1472
        %v1474 = vpop.f32.mrb[0].mxu0
        %v1475 = vpop.f32.mrb[0].mxu0
        %v1476 = vpop.f32.mrb[0].mxu0
        %1477 = vdwg.mxu0
        %1478 = vrot.lane.b32.xlu0 %v779, 64
        %v1479 = vpop.permute.xlu0 %1478
        %v1481 = vsel %vm786, %v1281, 0
        %v1484 = vsel %vm1290, %v1479, 0
        %1486 = vmatprep.subr.bf16.mxu0 0
        %1487 = vmatpush1.bf16.msra.mxu0 %v1484
        %1488 = vmatprep.subr.bf16.mxu0 0
        %1489 = vmatpush1.bf16.msra.mxu0 0
        %1490 = vmatprep.subr.bf16.mxu0 0
        %1491 = vmatpush1.bf16.msra.mxu0 0
        %1492 = vmatprep.subr.bf16.mxu0 0
        %1493 = vmatpush1.bf16.msra.mxu0 0
        %1494 = vmatprep.subr.bf16.mxu0 0
        %1495 = vmatpush1.bf16.msra.mxu0 0
        %1496 = vmatprep.subr.bf16.mxu0 0
        %1497 = vmatpush1.bf16.msra.mxu0 0
        %1498 = vmatprep.subr.bf16.mxu0 0
        %1499 = vmatpush1.bf16.msra.mxu0 0
        %1500 = vmatprep.subr.bf16.mxu0 0
        %1501 = vmatpush1.bf16.msra.mxu0 0
        %1502 = vmatprep.subr.bf16.mxu0 0
        %1503 = vmatpush1.bf16.msra.mxu0 0
        %1504 = vmatprep.subr.bf16.mxu0 0
        %1505 = vmatpush1.bf16.msra.mxu0 0
        %1506 = vmatprep.subr.bf16.mxu0 0
        %1507 = vmatpush1.bf16.msra.mxu0 0
        %1508 = vmatprep.subr.bf16.mxu0 0
        %1509 = vmatpush1.bf16.msra.mxu0 0
        %1510 = vmatprep.subr.bf16.mxu0 0
        %1511 = vmatpush1.bf16.msra.mxu0 0
        %1512 = vmatprep.subr.bf16.mxu0 0
        %1513 = vmatpush1.bf16.msra.mxu0 0
        %1514 = vmatprep.subr.bf16.mxu0 0
        %1515 = vmatpush1.bf16.msra.mxu0 0
        %1516 = vmatprep.subr.bf16.mxu0 0
        %1517 = vmatpush1.bf16.msra.mxu0 0
        %1518 = vmatprep.mubr.bf16.mxu0 0
        %1519 = vmatmul.mubr.bf16.gmra.mrb[0].mxu0 %v1481
        %v1520 = vpop.f32.mrb[0].mxu0
        %v1521 = vadd.f32 0.0, %v1520
        %v1522 = vpop.f32.mrb[0].mxu0
        %v1523 = vpop.f32.mrb[0].mxu0
        %v1524 = vpop.f32.mrb[0].mxu0
        %1525 = vdwg.mxu0
        %1526 = vrot.lane.b32.xlu0 %v780, 64
        %v1527 = vpop.permute.xlu0 %1526
        %v1529 = vsel %vm786, %v1282, 0
        %v1532 = vsel %vm1290, %v1527, 0
        %1534 = vmatprep.subr.bf16.mxu0 0
        %1535 = vmatpush1.bf16.msra.mxu0 %v1532
        %1536 = vmatprep.subr.bf16.mxu0 0
        %1537 = vmatpush1.bf16.msra.mxu0 0
        %1538 = vmatprep.subr.bf16.mxu0 0
        %1539 = vmatpush1.bf16.msra.mxu0 0
        %1540 = vmatprep.subr.bf16.mxu0 0
        %1541 = vmatpush1.bf16.msra.mxu0 0
        %1542 = vmatprep.subr.bf16.mxu0 0
        %1543 = vmatpush1.bf16.msra.mxu0 0
        %1544 = vmatprep.subr.bf16.mxu0 0
        %1545 = vmatpush1.bf16.msra.mxu0 0
        %1546 = vmatprep.subr.bf16.mxu0 0
        %1547 = vmatpush1.bf16.msra.mxu0 0
        %1548 = vmatprep.subr.bf16.mxu0 0
        %1549 = vmatpush1.bf16.msra.mxu0 0
        %1550 = vmatprep.subr.bf16.mxu0 0
        %1551 = vmatpush1.bf16.msra.mxu0 0
        %1552 = vmatprep.subr.bf16.mxu0 0
        %1553 = vmatpush1.bf16.msra.mxu0 0
        %1554 = vmatprep.subr.bf16.mxu0 0
        %1555 = vmatpush1.bf16.msra.mxu0 0
        %1556 = vmatprep.subr.bf16.mxu0 0
        %1557 = vmatpush1.bf16.msra.mxu0 0
        %1558 = vmatprep.subr.bf16.mxu0 0
        %1559 = vmatpush1.bf16.msra.mxu0 0
        %1560 = vmatprep.subr.bf16.mxu0 0
        %1561 = vmatpush1.bf16.msra.mxu0 0
        %1562 = vmatprep.subr.bf16.mxu0 0
        %1563 = vmatpush1.bf16.msra.mxu0 0
        %1564 = vmatprep.subr.bf16.mxu0 0
        %1565 = vmatpush1.bf16.msra.mxu0 0
        %1566 = vmatprep.mubr.bf16.mxu0 0
        %1567 = vmatmul.mubr.bf16.gmra.mrb[0].mxu0 %v1529
        %v1568 = vpop.f32.mrb[0].mxu0
        %v1569 = vadd.f32 0.0, %v1568
        %v1570 = vpop.f32.mrb[0].mxu0
        %v1571 = vpop.f32.mrb[0].mxu0
        %v1572 = vpop.f32.mrb[0].mxu0
        %1573 = vdwg.mxu0
        %1574 = vrot.lane.b32.xlu0 %v781, 64
        %v1575 = vpop.permute.xlu0 %1574
        %v1577 = vsel %vm786, %v1283, 0
        %v1580 = vsel %vm1290, %v1575, 0
        %1582 = vmatprep.subr.bf16.mxu0 0
        %1583 = vmatpush1.bf16.msra.mxu0 %v1580
        %1584 = vmatprep.subr.bf16.mxu0 0
        %1585 = vmatpush1.bf16.msra.mxu0 0
        %1586 = vmatprep.subr.bf16.mxu0 0
        %1587 = vmatpush1.bf16.msra.mxu0 0
        %1588 = vmatprep.subr.bf16.mxu0 0
        %1589 = vmatpush1.bf16.msra.mxu0 0
        %1590 = vmatprep.subr.bf16.mxu0 0
        %1591 = vmatpush1.bf16.msra.mxu0 0
        %1592 = vmatprep.subr.bf16.mxu0 0
        %1593 = vmatpush1.bf16.msra.mxu0 0
        %1594 = vmatprep.subr.bf16.mxu0 0
        %1595 = vmatpush1.bf16.msra.mxu0 0
        %1596 = vmatprep.subr.bf16.mxu0 0
        %1597 = vmatpush1.bf16.msra.mxu0 0
        %1598 = vmatprep.subr.bf16.mxu0 0
        %1599 = vmatpush1.bf16.msra.mxu0 0
        %1600 = vmatprep.subr.bf16.mxu0 0
        %1601 = vmatpush1.bf16.msra.mxu0 0
        %1602 = vmatprep.subr.bf16.mxu0 0
        %1603 = vmatpush1.bf16.msra.mxu0 0
        %1604 = vmatprep.subr.bf16.mxu0 0
        %1605 = vmatpush1.bf16.msra.mxu0 0
        %1606 = vmatprep.subr.bf16.mxu0 0
        %1607 = vmatpush1.bf16.msra.mxu0 0
        %1608 = vmatprep.subr.bf16.mxu0 0
        %1609 = vmatpush1.bf16.msra.mxu0 0
        %1610 = vmatprep.subr.bf16.mxu0 0
        %1611 = vmatpush1.bf16.msra.mxu0 0
        %1612 = vmatprep.subr.bf16.mxu0 0
        %1613 = vmatpush1.bf16.msra.mxu0 0
        %1614 = vmatprep.mubr.bf16.mxu0 0
        %1615 = vmatmul.mubr.bf16.gmra.mrb[0].mxu0 %v1577
        %v1616 = vpop.f32.mrb[0].mxu0
        %v1617 = vadd.f32 0.0, %v1616
        %v1618 = vpop.f32.mrb[0].mxu0
        %v1619 = vpop.f32.mrb[0].mxu0
        %v1620 = vpop.f32.mrb[0].mxu0
        %1621 = vdwg.mxu0
        %1622 = vrot.lane.b32.xlu0 %v782, 64
        %v1623 = vpop.permute.xlu0 %1622
        %v1625 = vsel %vm786, %v1284, 0
        %v1628 = vsel %vm1290, %v1623, 0
        %1630 = vmatprep.subr.bf16.mxu0 0
        %1631 = vmatpush1.bf16.msra.mxu0 %v1628
        %1632 = vmatprep.subr.bf16.mxu0 0
        %1633 = vmatpush1.bf16.msra.mxu0 0
        %1634 = vmatprep.subr.bf16.mxu0 0
        %1635 = vmatpush1.bf16.msra.mxu0 0
        %1636 = vmatprep.subr.bf16.mxu0 0
        %1637 = vmatpush1.bf16.msra.mxu0 0
        %1638 = vmatprep.subr.bf16.mxu0 0
        %1639 = vmatpush1.bf16.msra.mxu0 0
        %1640 = vmatprep.subr.bf16.mxu0 0
        %1641 = vmatpush1.bf16.msra.mxu0 0
        %1642 = vmatprep.subr.bf16.mxu0 0
        %1643 = vmatpush1.bf16.msra.mxu0 0
        %1644 = vmatprep.subr.bf16.mxu0 0
        %1645 = vmatpush1.bf16.msra.mxu0 0
        %1646 = vmatprep.subr.bf16.mxu0 0
        %1647 = vmatpush1.bf16.msra.mxu0 0
        %1648 = vmatprep.subr.bf16.mxu0 0
        %1649 = vmatpush1.bf16.msra.mxu0 0
        %1650 = vmatprep.subr.bf16.mxu0 0
        %1651 = vmatpush1.bf16.msra.mxu0 0
        %1652 = vmatprep.subr.bf16.mxu0 0
        %1653 = vmatpush1.bf16.msra.mxu0 0
        %1654 = vmatprep.subr.bf16.mxu0 0
        %1655 = vmatpush1.bf16.msra.mxu0 0
        %1656 = vmatprep.subr.bf16.mxu0 0
        %1657 = vmatpush1.bf16.msra.mxu0 0
        %1658 = vmatprep.subr.bf16.mxu0 0
        %1659 = vmatpush1.bf16.msra.mxu0 0
        %1660 = vmatprep.subr.bf16.mxu0 0
        %1661 = vmatpush1.bf16.msra.mxu0 0
        %1662 = vmatprep.mubr.bf16.mxu0 0
        %1663 = vmatmul.mubr.bf16.gmra.mrb[0].mxu0 %v1625
        %v1664 = vpop.f32.mrb[0].mxu0
        %v1665 = vadd.f32 0.0, %v1664
        %v1666 = vpop.f32.mrb[0].mxu0
        %v1667 = vpop.f32.mrb[0].mxu0
        %v1668 = vpop.f32.mrb[0].mxu0
        %1669 = vdwg.mxu0
        %1672 = vrot.lane.b32.xlu0 %v1425, 8
        %v1673 = vpop.permute.xlu0 %1672
        %1674 = vrot.lane.b32.xlu0 %v1473, 8
        %v1675 = vpop.permute.xlu0 %1674
        %1680 = vrot.lane.b32.xlu0 %v1521, 16
        %v1681 = vpop.permute.xlu0 %1680
        %1682 = vrot.lane.b32.xlu0 %v1569, 16
        %v1683 = vpop.permute.xlu0 %1682
        %1688 = vrot.lane.b32.xlu0 %v1617, 24
        %v1689 = vpop.permute.xlu0 %1688
        %1690 = vrot.lane.b32.xlu0 %v1665, 24
        %v1691 = vpop.permute.xlu0 %1690
        %v1694 = vsel %vm786, %v1329, %v1673
        %v1695 = vsel %vm786, %v1377, %v1675
        %vm1696 = vcmask 130048
        %v1697 = vsel %vm1696, %v1694, %v1681
        %v1698 = vsel %vm1696, %v1695, %v1683
        %vm1699 = vcmask 195584
        %v1700 = vsel %vm1699, %v1697, %v1689
        %v1701 = vsel %vm1699, %v1698, %v1691
        %v1702 = vpack.c.bf16 %v1701, %v1700
        %v1703 = vld [vmem:[%s573] sm:$0xf]
        %v1704 = vld [vmem:[%s573 + $0x4] sm:$0xf]
        %v1705 = vld [vmem:[%s573 + $0x8] sm:$0xf]
        %v1706 = vld [vmem:[%s573 + $0xc] sm:$0xf]
        %v1707 = vld [vmem:[%s576] sm:$0x1]
        %v1709 = vlaneseq
        %v1710 = vshrl.u32 %v1709, 7
        %v1711 = vsub.s32 0, %v1710
        %v1712 = vrot.slane %v1707, %v1711
        %v1718 = vunpack.c.l.b16 %v1703
        %v1719 = vunpack.c.l.b16 %v1704
        %v1720 = vunpack.c.l.b16 %v1705
        %v1721 = vunpack.c.l.b16 %v1706
        %v1722 = vpack.c.b16 %v1719, %v1718
        %v1723 = vpack.c.b16 %v1721, %v1720
        %v1727 = vsel %vm613, %v1702, 0
        %1729 = vmatprep.subr.bf16.mxu0 0
        %1730 = vmatpush1.bf16.msra.mxu0 %v1722
        %1731 = vmatprep.subr.bf16.mxu0 0
        %1732 = vmatpush1.bf16.msra.mxu0 %v1723
        %1733 = vmatprep.subr.bf16.mxu0 0
        %1734 = vmatpush1.bf16.msra.mxu0 0
        %1735 = vmatprep.subr.bf16.mxu0 0
        %1736 = vmatpush1.bf16.msra.mxu0 0
        %1737 = vmatprep.subr.bf16.mxu0 0
        %1738 = vmatpush1.bf16.msra.mxu0 0
        %1739 = vmatprep.subr.bf16.mxu0 0
        %1740 = vmatpush1.bf16.msra.mxu0 0
        %1741 = vmatprep.subr.bf16.mxu0 0
        %1742 = vmatpush1.bf16.msra.mxu0 0
        %1743 = vmatprep.subr.bf16.mxu0 0
        %1744 = vmatpush1.bf16.msra.mxu0 0
        %1745 = vmatprep.subr.bf16.mxu0 0
        %1746 = vmatpush1.bf16.msra.mxu0 0
        %1747 = vmatprep.subr.bf16.mxu0 0
        %1748 = vmatpush1.bf16.msra.mxu0 0
        %1749 = vmatprep.subr.bf16.mxu0 0
        %1750 = vmatpush1.bf16.msra.mxu0 0
        %1751 = vmatprep.subr.bf16.mxu0 0
        %1752 = vmatpush1.bf16.msra.mxu0 0
        %1753 = vmatprep.subr.bf16.mxu0 0
        %1754 = vmatpush1.bf16.msra.mxu0 0
        %1755 = vmatprep.subr.bf16.mxu0 0
        %1756 = vmatpush1.bf16.msra.mxu0 0
        %1757 = vmatprep.subr.bf16.mxu0 0
        %1758 = vmatpush1.bf16.msra.mxu0 0
        %1759 = vmatprep.subr.bf16.mxu0 0
        %1760 = vmatpush1.bf16.msra.mxu0 0
        %1761 = vmatprep.mubr.bf16.mxu0 0
        %1762 = vmatmul.mubr.bf16.gmra.mrb[0].mxu0 %v1727
        %v1763 = vpop.f32.mrb[0].mxu0
        %v1764 = vadd.f32 %v1712, %v1763
        %v1765 = vpop.f32.mrb[0].mxu0
        %v1766 = vpop.f32.mrb[0].mxu0
        %v1767 = vadd.f32 %v1712, %v1766
        %v1768 = vpop.f32.mrb[0].mxu0
        %1769 = vdwg.mxu0
        %v1770 = vadd.f32 %v609, %v1764
        %v1771 = vadd.f32 %v610, %v1767
        %v1772 = vld [vmem:[%s579] sm:$0x1]
        %v1773 = vld [vmem:[%s582] sm:$0x1]
        %v1774 = vsel %vm613, %v1770, 0.0
        %1775 = vadd.xlane.f32.xlu0 %v1774
        %v1776 = vpop.xlane.xlu0 %1775
        %v1777 = vsel %vm613, %v1771, 0.0
        %1778 = vadd.xlane.f32.xlu0 %v1777
        %v1779 = vpop.xlane.xlu0 %1778
        %v1780 = vmul.f32 %v1776, %v620
        %v1781 = vmul.f32 %v1779, %v620
        %v1782 = vsub.f32 %v1770, %v1780
        %v1783 = vsub.f32 %v1771, %v1781
        %v1784 = vmul.f32 %v1782, %v1782
        %v1785 = vmul.f32 %v1783, %v1783
        %v1786 = vsel %vm613, %v1784, 0.0
        %1787 = vadd.xlane.f32.xlu0 %v1786
        %v1788 = vpop.xlane.xlu0 %1787
        %v1789 = vsel %vm613, %v1785, 0.0
        %1790 = vadd.xlane.f32.xlu0 %v1789
        %v1791 = vpop.xlane.xlu0 %1790
        %v1792 = vmul.f32 %v1788, %v620
        %v1793 = vmul.f32 %v1791, %v620
        %v1794 = vadd.f32 %v1792, 1e-05
        %v1795 = vadd.f32 %v1793, 1e-05
        %v1796 = vrsqrt.pop %v1794
        %v1797 = vrsqrt.pop %v1795
        %v1798 = vmul.f32 %v1782, %v1796
        %v1799 = vmul.f32 %v1783, %v1797
        %v1801 = vlaneseq
        %v1802 = vshrl.u32 %v1801, 7
        %v1803 = vsub.s32 0, %v1802
        %v1804 = vrot.slane %v1772, %v1803
        %v1806 = vmul.f32 %v1798, %v1804
        %v1807 = vmul.f32 %v1799, %v1804
        %v1809 = vlaneseq
        %v1810 = vshrl.u32 %v1809, 7
        %v1811 = vsub.s32 0, %v1810
        %v1812 = vrot.slane %v1773, %v1811
        %v1814 = vadd.f32 %v1806, %v1812
        %v1815 = vadd.f32 %v1807, %v1812
        %v1816 = vpack.c.bf16 %v1815, %v1814
        %v1817 = vld [vmem:[%s587] sm:$0xf]
        %v1818 = vld [vmem:[%s587 + $0x4] sm:$0xf]
        %v1819 = vld [vmem:[%s587 + $0x8] sm:$0xf]
        %v1820 = vld [vmem:[%s587 + $0xc] sm:$0xf]
        %v1821 = vld [vmem:[%s590] sm:$0x1]
        %v1823 = vlaneseq
        %v1824 = vshrl.u32 %v1823, 7
        %v1825 = vsub.s32 0, %v1824
        %v1826 = vrot.slane %v1821, %v1825
        %v1832 = vunpack.c.l.b16 %v1817
        %v1833 = vunpack.c.l.b16 %v1818
        %v1834 = vunpack.c.l.b16 %v1819
        %v1835 = vunpack.c.l.b16 %v1820
        %v1836 = vpack.c.b16 %v1833, %v1832
        %v1837 = vpack.c.b16 %v1835, %v1834
        %v1841 = vsel %vm613, %v1816, 0
        %1843 = vmatprep.subr.bf16.mxu0 0
        %1844 = vmatpush1.bf16.msra.mxu0 %v1836
        %1845 = vmatprep.subr.bf16.mxu0 0
        %1846 = vmatpush1.bf16.msra.mxu0 %v1837
        %1847 = vmatprep.subr.bf16.mxu0 0
        %1848 = vmatpush1.bf16.msra.mxu0 0
        %1849 = vmatprep.subr.bf16.mxu0 0
        %1850 = vmatpush1.bf16.msra.mxu0 0
        %1851 = vmatprep.subr.bf16.mxu0 0
        %1852 = vmatpush1.bf16.msra.mxu0 0
        %1853 = vmatprep.subr.bf16.mxu0 0
        %1854 = vmatpush1.bf16.msra.mxu0 0
        %1855 = vmatprep.subr.bf16.mxu0 0
        %1856 = vmatpush1.bf16.msra.mxu0 0
        %1857 = vmatprep.subr.bf16.mxu0 0
        %1858 = vmatpush1.bf16.msra.mxu0 0
        %1859 = vmatprep.subr.bf16.mxu0 0
        %1860 = vmatpush1.bf16.msra.mxu0 0
        %1861 = vmatprep.subr.bf16.mxu0 0
        %1862 = vmatpush1.bf16.msra.mxu0 0
        %1863 = vmatprep.subr.bf16.mxu0 0
        %1864 = vmatpush1.bf16.msra.mxu0 0
        %1865 = vmatprep.subr.bf16.mxu0 0
        %1866 = vmatpush1.bf16.msra.mxu0 0
        %1867 = vmatprep.subr.bf16.mxu0 0
        %1868 = vmatpush1.bf16.msra.mxu0 0
        %1869 = vmatprep.subr.bf16.mxu0 0
        %1870 = vmatpush1.bf16.msra.mxu0 0
        %1871 = vmatprep.subr.bf16.mxu0 0
        %1872 = vmatpush1.bf16.msra.mxu0 0
        %1873 = vmatprep.subr.bf16.mxu0 0
        %1874 = vmatpush1.bf16.msra.mxu0 0
        %1875 = vmatprep.mubr.bf16.mxu0 0
        %1876 = vmatmul.mubr.bf16.gmra.mrb[0].mxu0 %v1841
        %v1877 = vpop.f32.mrb[0].mxu0
        %v1878 = vadd.f32 %v1826, %v1877
        %v1879 = vpop.f32.mrb[0].mxu0
        %v1880 = vpop.f32.mrb[0].mxu0
        %v1881 = vadd.f32 %v1826, %v1880
        %v1882 = vpop.f32.mrb[0].mxu0
        %1883 = vdwg.mxu0
        %v1884 = vmul.f32 %v1878, 1.702
        %v1885 = vmul.f32 %v1881, 1.702
        %v1886 = vxor.u32 %v1884, 2147483648
        %v1887 = vxor.u32 %v1885, 2147483648
        %v1888 = vmul.f32 %v1886, 1.442695
        %v1889 = vpow.pop %v1888
        %v1890 = vmul.f32 %v1887, 1.442695
        %v1891 = vpow.pop %v1890
        %v1892 = vadd.f32 %v1889, 1.0
        %v1893 = vadd.f32 %v1891, 1.0
        %v1894 = vrcp.pop %v1892
        %v1895 = vmul.f32 1.0, %v1894
        %v1896 = vrcp.pop %v1893
        %v1897 = vmul.f32 1.0, %v1896
        %v1898 = vmul.f32 %v1878, %v1895
        %v1899 = vmul.f32 %v1881, %v1897
        %v1900 = vpack.c.bf16 %v1899, %v1898
        %v1901 = vld [vmem:[%s595] sm:$0xf]
        %v1902 = vld [vmem:[%s595 + $0x4] sm:$0xf]
        %v1903 = vld [vmem:[%s595 + $0x8] sm:$0xf]
        %v1904 = vld [vmem:[%s595 + $0xc] sm:$0xf]
        %v1905 = vld [vmem:[%s595 + $0x10] sm:$0xf]
        %v1906 = vld [vmem:[%s595 + $0x14] sm:$0xf]
        %v1907 = vld [vmem:[%s595 + $0x18] sm:$0xf]
        %v1908 = vld [vmem:[%s595 + $0x1c] sm:$0xf]
        %v1909 = vld [vmem:[%s595 + $0x20] sm:$0xf]
        %v1910 = vld [vmem:[%s595 + $0x24] sm:$0xf]
        %v1911 = vld [vmem:[%s595 + $0x28] sm:$0xf]
        %v1912 = vld [vmem:[%s595 + $0x2c] sm:$0xf]
        %v1913 = vld [vmem:[%s595 + $0x30] sm:$0xf]
        %v1914 = vld [vmem:[%s595 + $0x34] sm:$0xf]
        %v1915 = vld [vmem:[%s595 + $0x38] sm:$0xf]
        %v1916 = vld [vmem:[%s595 + $0x3c] sm:$0xf]
        %v1917 = vld [vmem:[%s598] sm:$0x1]
        %v1919 = vlaneseq
        %v1920 = vshrl.u32 %v1919, 7
        %v1921 = vsub.s32 0, %v1920
        %v1922 = vrot.slane %v1917, %v1921
        %v1940 = vunpack.c.l.b16 %v1901
        %v1941 = vunpack.c.l.b16 %v1902
        %v1942 = vunpack.c.l.b16 %v1903
        %v1943 = vunpack.c.l.b16 %v1904
        %v1944 = vunpack.c.l.b16 %v1905
        %v1945 = vunpack.c.l.b16 %v1906
        %v1946 = vunpack.c.l.b16 %v1907
        %v1947 = vunpack.c.l.b16 %v1908
        %v1948 = vunpack.c.l.b16 %v1909
        %v1949 = vunpack.c.l.b16 %v1910
        %v1950 = vunpack.c.l.b16 %v1911
        %v1951 = vunpack.c.l.b16 %v1912
        %v1952 = vunpack.c.l.b16 %v1913
        %v1953 = vunpack.c.l.b16 %v1914
        %v1954 = vunpack.c.l.b16 %v1915
        %v1955 = vunpack.c.l.b16 %v1916
        %v1956 = vpack.c.b16 %v1941, %v1940
        %v1957 = vpack.c.b16 %v1943, %v1942
        %v1958 = vpack.c.b16 %v1945, %v1944
        %v1959 = vpack.c.b16 %v1947, %v1946
        %v1960 = vpack.c.b16 %v1949, %v1948
        %v1961 = vpack.c.b16 %v1951, %v1950
        %v1962 = vpack.c.b16 %v1953, %v1952
        %v1963 = vpack.c.b16 %v1955, %v1954
        %1972 = vmatprep.subr.bf16.mxu0 0
        %1973 = vmatpush1.bf16.msra.mxu0 %v1956
        %1974 = vmatprep.subr.bf16.mxu0 0
        %1975 = vmatpush1.bf16.msra.mxu0 %v1957
        %1976 = vmatprep.subr.bf16.mxu0 0
        %1977 = vmatpush1.bf16.msra.mxu0 %v1958
        %1978 = vmatprep.subr.bf16.mxu0 0
        %1979 = vmatpush1.bf16.msra.mxu0 %v1959
        %1980 = vmatprep.subr.bf16.mxu0 0
        %1981 = vmatpush1.bf16.msra.mxu0 %v1960
        %1982 = vmatprep.subr.bf16.mxu0 0
        %1983 = vmatpush1.bf16.msra.mxu0 %v1961
        %1984 = vmatprep.subr.bf16.mxu0 0
        %1985 = vmatpush1.bf16.msra.mxu0 %v1962
        %1986 = vmatprep.subr.bf16.mxu0 0
        %1987 = vmatpush1.bf16.msra.mxu0 %v1963
        %1988 = vmatprep.subr.bf16.mxu0 0
        %1989 = vmatpush1.bf16.msra.mxu0 0
        %1990 = vmatprep.subr.bf16.mxu0 0
        %1991 = vmatpush1.bf16.msra.mxu0 0
        %1992 = vmatprep.subr.bf16.mxu0 0
        %1993 = vmatpush1.bf16.msra.mxu0 0
        %1994 = vmatprep.subr.bf16.mxu0 0
        %1995 = vmatpush1.bf16.msra.mxu0 0
        %1996 = vmatprep.subr.bf16.mxu0 0
        %1997 = vmatpush1.bf16.msra.mxu0 0
        %1998 = vmatprep.subr.bf16.mxu0 0
        %1999 = vmatpush1.bf16.msra.mxu0 0
        %2000 = vmatprep.subr.bf16.mxu0 0
        %2001 = vmatpush1.bf16.msra.mxu0 0
        %2002 = vmatprep.subr.bf16.mxu0 0
        %2003 = vmatpush1.bf16.msra.mxu0 0
        %2004 = vmatprep.mubr.bf16.mxu0 0
        %2005 = vmatmul.mubr.bf16.gmra.mrb[0].mxu0 %v1900
        %v2006 = vpop.f32.mrb[0].mxu0
        %v2007 = vadd.f32 %v1922, %v2006
        %v2008 = vpop.f32.mrb[0].mxu0
        %v2009 = vpop.f32.mrb[0].mxu0
        %v2010 = vadd.f32 %v1922, %v2009
        %v2011 = vpop.f32.mrb[0].mxu0
        %2012 = vdwg.mxu0
        %v2013 = vadd.f32 %v1770, %v2007
        %v2014 = vadd.f32 %v1771, %v2010
        %2015 = vst.msk [vmem:[#allocation2] sm:$0xff] %vm613, %v2013
        %2016 = vst.msk [vmem:[#allocation2 + $0x8] sm:$0xff] %vm613, %v2014
        %p2017 = scmp.eq.s32.totalorder %s25, 1
        // Predicated region
        $region77: #{tpu_custom_call.1} parent=71 // pred_check
          %p2018 = pneg %p2017
        $region78: #{tpu_custom_call.1} parent=71 // pred_check_branch
          %2020 = sbr.rel (%p2018) target = $region80
        $region79: #{tpu_custom_call.1} parent=71 // pred_region
          %2021 = vst.msk [vmem:[#allocation3] sm:$0xff] %vm613, %v2013
          %2022 = vst.msk [vmem:[#allocation3 + $0x8] sm:$0xff] %vm613, %v2014
        $region80: #{tpu_custom_call.1} parent=71 // pred_fallthru
          _
        // Predicated region
        $region81: #{tpu_custom_call.1} parent=71 // pred_check
          %p2023 = pneg %p371
        $region82: #{tpu_custom_call.1} parent=71 // pred_check_branch
          %2025 = sbr.rel (%p2023) target = $region84
        $region83: #{tpu_custom_call.1} parent=71 // pred_region
          %s2027 = ssub.s32 256, 256
          %2028 = vsyncadd [#allocation4], %s2027
          %s2029 = sshll.u32 [#allocation3], 4
          %s2030 = int_to_ptr.vmem [resolvable:$true] %s2029
          %2035 = dma.vmem_to_hbm [thread:$0]  %s2030, 256, %s13, [#allocation4], 128, 128, 8
        $region84: #{tpu_custom_call.1} parent=71 // pred_fallthru
          _
        // Predicated region
        $region85: #{tpu_custom_call.1} parent=71 // pred_check
          %p2036 = pneg %p371
        $region86: #{tpu_custom_call.1} parent=71 // pred_check_branch
          %2038 = sbr.rel (%p2036) target = $region88
        $region87: #{tpu_custom_call.1} parent=71 // pred_region
          %2039 = dma.done [#allocation4], 256
        $region88: #{tpu_custom_call.1} parent=71 // pred_fallthru
          _
      $region72: #{tpu_custom_call.1} parent=5 // pred_fallthru
        _
      %p2040 = scmp.le.s32.totalorder 2, %s20
      // Predicated region
      $region89: #{tpu_custom_call.1} parent=5 // pred_check
        %p2041 = pneg %p2040
      $region90: #{tpu_custom_call.1} parent=5 // pred_check_branch
        %2043 = sbr.rel (%p2041) target = $region92
      $region91: #{tpu_custom_call.1} parent=5 // pred_region
        %s2044 = ssub.s32 %s20, 2
      $region92: #{tpu_custom_call.1} parent=5 // pred_fallthru
        _
    $region6: #{tpu_custom_call.1} parent=1 // loop_footer
      %s24 = sadd.s32 1, %s20
    $region7: #{tpu_custom_call.1} parent=1 // loop_footer_branch
      %19 = sbr.rel target = $region3
    $region8: #{tpu_custom_call.1} parent=1 // loop_exit
      _
    %2045 = vsyncpa [#allocation4], 1
    %s2046 = scalar_lea.sflag [#allocation4], 1
    %2047 = vsyncpa %s2046, 1

</llo_original>
